<compile_context>
chip_gen: v7x
topology: tpu7x:2x2x1
jax: 0.10.0
libtpu: 0.0.40
codegen_flags: <defaults>
</compile_context>

<pallas_src>
import functools

import numpy as np

import jax
import jax.numpy as jnp
from jax import lax
from jax.experimental import pallas as pl
from jax.experimental.pallas import tpu as pltpu


# ---------------------------------------------------------------------------
# Constant operator matrices (numpy, built once in the wrapper).
# ---------------------------------------------------------------------------

def _bilinear2x_matrix(n_in):
    """(n_in, 2*n_in) matrix M with (x @ M) = 2x bilinear upsample of x along one axis.

    Half-pixel centers with edge clamping, identical to
    torch.nn.functional.interpolate(scale_factor=2, mode='bilinear',
    align_corners=False) and jax.image.resize(..., method='bilinear').
    """
    n_out = 2 * n_in
    m = np.zeros((n_in, n_out), np.float32)
    for j in range(n_out):
        pos = (j + 0.5) / 2.0 - 0.5
        lo = int(np.floor(pos))
        frac = pos - lo
        i0 = min(max(lo, 0), n_in - 1)
        i1 = min(max(lo + 1, 0), n_in - 1)
        m[i0, j] += 1.0 - frac
        m[i1, j] += frac
    return m


def _build_col_operator(W, p):
    """(W, 2W + 2p): horizontal 2x bilinear upsample + conv zero-pad columns."""
    W2 = 2 * W
    uh = np.zeros((W, W2 + 2 * p), np.float32)
    uh[:, p:p + W2] = _bilinear2x_matrix(W)
    return uh


def _build_row_operator(H, p, S, nblk, off_lo, R_slab, Cin):
    """(nblk, Cin*R_out, R_slab*Cin): per-row-block vertical 2x bilinear upsample.

    Edge clamping and the conv's zero-padding rows are baked into the matrix, so
    the kernel needs no boundary branches.  It is expanded block-diagonally over
    channels so the kernel applies it with a single 2-D matmul; rows are ordered
    (channel, strip_row), columns (slab_row, channel) to match the kernel layout.
    """
    H2, TH = 2 * H, 2 * S
    R_out = TH + 2 * p
    m = _bilinear2x_matrix(H)                       # (H, H2)
    ops = np.zeros((nblk, R_out, R_slab), np.float32)
    for rb in range(nblk):
        r0 = TH * rb
        for t in range(R_out):
            j = r0 - p + t                          # upsampled-row index of strip row t
            if 0 <= j < H2:                         # else: conv zero-pad row -> stays 0
                for i in np.nonzero(m[:, j])[0]:
                    s = int(i) + off_lo - S * rb    # slab position of original row i
                    assert 0 <= s < R_slab, (rb, t, int(i), s)
                    ops[rb, t, s] += m[i, j]
    uv = np.zeros((nblk, Cin, R_out, R_slab, Cin), np.float32)
    for c in range(Cin):
        uv[:, c, :, :, c] = ops
    return uv.reshape(nblk, Cin * R_out, R_slab * Cin)


def _pick_row_block(H2, W2, N, max_pix=4096):
    """Even divisor TH of H2 such that the (Cout, TH*W2) output block is lane-dense
    (TH*W2 % 128 == 0, or TH == H2), TH*W2 <= max_pix (vreg / grid-overhead balance),
    and the grid keeps >= 2 parallel steps when possible (v7x has 2 TensorCores)."""
    valid = [t for t in range(2, H2 + 1, 2)
             if H2 % t == 0 and ((t * W2) % 128 == 0 or t == H2)]
    for pred in (lambda t: t * W2 <= max_pix and N * (H2 // t) >= 2,
                 lambda t: t * W2 <= max_pix):
        cands = [t for t in valid if pred(t)]
        if cands:
            return max(cands)
    return min(valid, key=lambda t: t * W2)


# ---------------------------------------------------------------------------
# Kernel
# ---------------------------------------------------------------------------

def _upconv_kernel(x_ref, uh_ref, uv_ref, w_ref, b_ref, o_ref, *,
                   k, cin, w_in, w2, wq_cols, s_rows, r_slab, r_out, th):
    """One (batch, output-row-block) tile per grid step.

    x_ref : (Hx, Cin, W)              whole (row-padded) input image, bf16
    uh_ref: (W, W2 + 2p)              horizontal upsample + col-pad operator, bf16
    uv_ref: (Cin*R_out, R_slab*Cin)   per-block vertical upsample + row-pad operator, f32
    w_ref : (Cout, k*k*Cin)           conv weights in im2col layout, bf16
    b_ref : (Cout, 1)                 bias, f32
    o_ref : (Cout, TH*W2)             output block, channels-first, lane-dense
    """
    rb = pl.program_id(1)
    start = pl.multiple_of(rb * s_rows, s_rows)

    # Input row slab covering everything this block needs (upsample + conv halo).
    slab = x_ref[pl.ds(start, r_slab)]                         # (R_slab, Cin, W) bf16
    slab2 = slab.reshape(r_slab * cin, w_in)

    # (1) Horizontal 2x bilinear upsample + conv zero-pad columns: one MXU matmul.
    hs = lax.dot_general(slab2, uh_ref[...],
                         dimension_numbers=(((1,), (0,)), ((), ())),
                         preferred_element_type=jnp.float32)   # (R_slab*Cin, Wq) f32

    # (2) Vertical 2x bilinear upsample + conv zero-pad rows.  Clamping / padding is
    #     baked into uv[rb]; kept in f32 to avoid one extra requantization.
    strip = lax.dot_general(uv_ref[...], hs,
                            dimension_numbers=(((1,), (0,)), ((), ())),
                            preferred_element_type=jnp.float32)  # (Cin*R_out, Wq)
    strip = strip.reshape(cin, r_out, wq_cols).astype(jnp.bfloat16)

    # (3) Conv + bias + ReLU: im2col the k*k taps of the (in-register) row strip and
    #     run ONE bf16 MXU matmul with f32 accumulation.  The kw shifts are static
    #     slices of the small VMEM-resident strip, not of the HBM-fed input block.
    n_pix = th * w2
    taps = [strip[:, kh:kh + th, kw:kw + w2]                   # (Cin, TH, W2) each
            for kh in range(k) for kw in range(k)]
    patch = jnp.concatenate(taps, axis=0).reshape(k * k * cin, n_pix)

    acc = lax.dot_general(w_ref[...], patch,
                          dimension_numbers=(((1,), (0,)), ((), ())),
                          preferred_element_type=jnp.float32)  # (Cout, TH*W2)
    acc = jnp.maximum(acc + b_ref[...], 0.0)                   # bias + ReLU
    o_ref[...] = acc.astype(o_ref.dtype)


# ---------------------------------------------------------------------------
# Wrapper
# ---------------------------------------------------------------------------

def upsample_conv_layer(x_nchw, weight_oihw, bias, *, kernel_size, scale_factor=2,
                        row_block=None):
    """Equivalent of UpsampleConvLayer.forward (activation='relu', norm=None)."""
    N, Cin, H, W = x_nchw.shape
    Cout = weight_oihw.shape[0]
    k = kernel_size
    assert k % 2 == 1, "only odd kernel_size reproduces the PyTorch module's shapes"
    assert scale_factor == 2, "fused upsample path implements the default scale_factor=2"
    p = k // 2
    H2, W2 = 2 * H, 2 * W
    Wq = W2 + 2 * p
    KKC = k * k * Cin

    TH = row_block if row_block is not None else _pick_row_block(H2, W2, N)
    assert TH % 2 == 0 and H2 % TH == 0, "row_block must be an even divisor of 2*H"
    assert (TH * W2) % 128 == 0 or TH == H2
    S = TH // 2                            # input rows consumed per output-row block
    nblk = H2 // TH
    off_lo, off_hi = (p + 2) // 2, p // 2
    R_slab = S + off_lo + off_hi + 1       # input rows needed per block (incl. halo)
    R_out = TH + 2 * p                     # upsampled + conv-padded rows per block
    pad_t, pad_b = off_lo, off_hi + 1
    Hx = H + pad_t + pad_b

    # ---- cheap wrapper-side prep, all on the small *pre-upsample* tensor ----------
    # Row-major (H, Cin, W) layout + bf16 cast + halo rows fuse into one small XLA
    # copy; in a real network the producing layer would emit this layout directly.
    x_r = jnp.transpose(x_nchw, (0, 2, 1, 3)).astype(jnp.bfloat16)   # (N, H, Cin, W)
    x_r = jnp.pad(x_r, ((0, 0), (pad_t, pad_b), (0, 0), (0, 0)))     # (N, Hx, Cin, W)

    uh = jnp.asarray(_build_col_operator(W, p), dtype=jnp.bfloat16)              # (W, Wq)
    uv = jnp.asarray(_build_row_operator(H, p, S, nblk, off_lo, R_slab, Cin),
                     dtype=jnp.float32)                         # (nblk, Cin*R_out, R_slab*Cin)
    w2d = jnp.transpose(weight_oihw, (0, 2, 3, 1)).reshape(Cout, KKC).astype(jnp.bfloat16)
    b2d = bias.reshape(Cout, 1).astype(jnp.float32)

    kern = functools.partial(_upconv_kernel, k=k, cin=Cin, w_in=W, w2=W2,
                             wq_cols=Wq, s_rows=S, r_slab=R_slab, r_out=R_out, th=TH)

    # ---- VMEM budget computed from the actual block sizes (review item #10) -------
    out_isz = x_nchw.dtype.itemsize
    n_pix = TH * W2
    grid_blocks = 2 * (Cin * Hx * W * 2 + Cout * n_pix * out_isz)        # double-buffered
    const_blocks = 2 * (W * Wq * 2 + (Cin * R_out) * (R_slab * Cin) * 4
                        + Cout * KKC * 2 + Cout * 4)
    interm = 2 * (R_slab * Cin * W * 2 + R_slab * Cin * Wq * 4
                  + Cin * R_out * Wq * 6 + 2 * KKC * n_pix * 2 + Cout * n_pix * 4)
    try:
        vmem_cap = int(pltpu.get_tpu_info().vmem_capacity_bytes)
    except Exception:
        vmem_cap = 64 * 1024 * 1024       # v7x is the smallest (64 MiB per TensorCore)
    vmem_limit = int(min(max(grid_blocks + const_blocks + interm, 16 * 1024 * 1024),
                         (vmem_cap * 5) // 8))

    out_flat = pl.pallas_call(
        kern,
        out_shape=jax.ShapeDtypeStruct((N, Cout, H2 * W2), x_nchw.dtype),
        grid_spec=pltpu.PrefetchScalarGridSpec(
            num_scalar_prefetch=0,
            grid=(N, nblk),                # batch x output-row-blocks, both parallel
            in_specs=[
                # Whole (small) input image per batch element; block index constant
                # across row blocks -> DMA'd once per batch element and reused.
                # TODO(synk): halo-row window DMA + single-buffering for huge images.
                pl.BlockSpec((None, Hx, Cin, W), lambda n, rb: (n, 0, 0, 0)),
                pl.BlockSpec((W, Wq), lambda n, rb: (0, 0)),
                pl.BlockSpec((None, Cin * R_out, R_slab * Cin),
                             lambda n, rb: (rb, 0, 0)),
                pl.BlockSpec((Cout, KKC), lambda n, rb: (0, 0)),
                pl.BlockSpec((Cout, 1), lambda n, rb: (0, 0)),
            ],
            # Channels-first, lane-dense output block.
            out_specs=pl.BlockSpec((None, Cout, TH * W2), lambda n, rb: (n, 0, rb)),
        ),
        compiler_params=pltpu.CompilerParams(
            dimension_semantics=("parallel", "parallel"),
            vmem_limit_bytes=vmem_limit,
        ),
    )(x_r, uh, uv, w2d, b2d)

    # Metadata-only reshape straight to NCHW (no output transpose round trip).
    return out_flat.reshape(N, Cout, H2, W2)


if __name__ == "__main__":
    # Module config: in_channels=4, out_channels=8, kernel_size=3, stride=1,
    # activation='relu', norm=None, scale_factor=2.
    in_channels, out_channels, kernel_size = 4, 8, 3
    N, H, W = 2, 16, 16

    key = jax.random.PRNGKey(0)
    kx, kw_, kb = jax.random.split(key, 3)

    x = jax.random.normal(kx, (N, in_channels, H, W), dtype=jnp.float32)

    # Deterministic parameter init (Kaiming-uniform-like bounds, as nn.Conv2d).
    fan_in = in_channels * kernel_size * kernel_size
    bound = 1.0 / (fan_in ** 0.5)
    weight = jax.random.uniform(
        kw_, (out_channels, in_channels, kernel_size, kernel_size),
        minval=-bound, maxval=bound, dtype=jnp.float32)
    bias = jax.random.uniform(
        kb, (out_channels,), minval=-bound, maxval=bound, dtype=jnp.float32)

    out = upsample_conv_layer(x, weight, bias, kernel_size=kernel_size, scale_factor=2)
    out = jax.block_until_ready(out)

    H2, W2 = 2 * H, 2 * W
    assert out.shape == (N, out_channels, H2, W2), out.shape
    assert out.dtype == jnp.float32
    assert bool(jnp.all(out >= 0.0))  # ReLU applied

    # Reference: resize -> conv -> bias -> ReLU in plain JAX/XLA, using the SAME bf16
    # quantization of x / weights as the kernel, so the tolerance only absorbs the
    # kernel's internal bf16 rounding and still catches structural mistakes.
    xq = x.astype(jnp.bfloat16).astype(jnp.float32)
    wq = weight.astype(jnp.bfloat16).astype(jnp.float32)
    ref_up = jax.image.resize(xq, (N, in_channels, H2, W2), method="bilinear")
    ref = lax.conv_general_dilated(
        ref_up, wq, window_strides=(1, 1),
        padding=[(kernel_size // 2, kernel_size // 2)] * 2,
        dimension_numbers=("NCHW", "OIHW", "NCHW"))
    ref = jnp.maximum(ref + bias.reshape(1, -1, 1, 1), 0.0)
    err = float(jnp.max(jnp.abs(out - ref)))
    assert err < 2e-2, f"max abs err vs reference: {err}"

    print("KERNEL_OK")
</pallas_src>

<mosaic_0001>
module attributes {stable_mosaic.version = 11 : i64} {
  func.func @_upconv_kernel(%arg0: i32, %arg1: i32, %arg2: memref<1x18x4x16xbf16, #tpu.memory_space<vmem>>, %arg3: memref<16x34xbf16, #tpu.memory_space<vmem>>, %arg4: memref<1x136x72xf32, #tpu.memory_space<vmem>>, %arg5: memref<8x36xbf16, #tpu.memory_space<vmem>>, %arg6: memref<8x1xf32, #tpu.memory_space<vmem>>, %arg7: memref<1x8x1024xf32, #tpu.memory_space<vmem>>) attributes {dimension_semantics = [#tpu.dimension_semantics<parallel>, #tpu.dimension_semantics<parallel>], iteration_bounds = array<i64: 2, 1>, scalar_prefetch = 0 : i64, scratch_operands = 0 : i64, tpu.core_type = #tpu.core_type<tc>, window_params = [{transform_indices = @transform_0, window_bounds = array<i64: 1, 18, 4, 16>}, {pipeline_mode = #tpu.pipeline_mode<synchronous>, transform_indices = @transform_1, window_bounds = array<i64: 16, 34>}, {transform_indices = @transform_2, window_bounds = array<i64: 1, 136, 72>}, {pipeline_mode = #tpu.pipeline_mode<synchronous>, transform_indices = @transform_3, window_bounds = array<i64: 8, 36>}, {pipeline_mode = #tpu.pipeline_mode<synchronous>, transform_indices = @transform_4, window_bounds = array<i64: 8, 1>}, {transform_indices = @transform_5, window_bounds = array<i64: 1, 8, 1024>}]} {
    %c16_i32 = arith.constant 16 : i32
    %0 = arith.muli %arg1, %c16_i32 : i32
    %1 = tpu.assume_multiple %0, 16 : i32
    %c0 = arith.constant 0 : index
    %2 = arith.index_cast %1 : i32 to index
    %c0_0 = arith.constant 0 : index
    %c0_1 = arith.constant 0 : index
    %3 = vector.load %arg2[%c0, %2, %c0_0, %c0_1] : memref<1x18x4x16xbf16, #tpu.memory_space<vmem>>, vector<1x18x4x16xbf16>
    %4 = vector.shape_cast %3 : vector<1x18x4x16xbf16> to vector<18x4x16xbf16>
    %5 = vector.shape_cast %4 : vector<18x4x16xbf16> to vector<72x16xbf16>
    %c0_2 = arith.constant 0 : index
    %c0_3 = arith.constant 0 : index
    %6 = vector.load %arg3[%c0_2, %c0_3] : memref<16x34xbf16, #tpu.memory_space<vmem>>, vector<16x34xbf16>
    %cst = arith.constant dense<0.000000e+00> : vector<72x34xf32>
    %7 = tpu.matmul %5, %6, %cst {dimension_numbers = #tpu.dot_dimension_numbers<[1], [0], [0], [1], [0, 0, 1, 1], [], []>} : vector<72x16xbf16>, vector<16x34xbf16>, vector<72x34xf32> -> vector<72x34xf32>
    %c0_4 = arith.constant 0 : index
    %c0_5 = arith.constant 0 : index
    %c0_6 = arith.constant 0 : index
    %8 = vector.load %arg4[%c0_4, %c0_5, %c0_6] : memref<1x136x72xf32, #tpu.memory_space<vmem>>, vector<1x136x72xf32>
    %9 = vector.shape_cast %8 : vector<1x136x72xf32> to vector<136x72xf32>
    %cst_7 = arith.constant dense<0.000000e+00> : vector<136x34xf32>
    %10 = tpu.matmul %9, %7, %cst_7 {dimension_numbers = #tpu.dot_dimension_numbers<[1], [0], [0], [1], [0, 0, 1, 1], [], []>} : vector<136x72xf32>, vector<72x34xf32>, vector<136x34xf32> -> vector<136x34xf32>
    %11 = vector.shape_cast %10 : vector<136x34xf32> to vector<4x34x34xf32>
    %12 = arith.truncf %11 : vector<4x34x34xf32> to vector<4x34x34xbf16>
    %13 = vector.extract_strided_slice %12 {offsets = [0, 0, 0], sizes = [4, 32, 32], strides = [1, 1, 1]} : vector<4x34x34xbf16> to vector<4x32x32xbf16>
    %14 = vector.extract_strided_slice %12 {offsets = [0, 0, 1], sizes = [4, 32, 32], strides = [1, 1, 1]} : vector<4x34x34xbf16> to vector<4x32x32xbf16>
    %15 = vector.extract_strided_slice %12 {offsets = [0, 0, 2], sizes = [4, 32, 32], strides = [1, 1, 1]} : vector<4x34x34xbf16> to vector<4x32x32xbf16>
    %16 = vector.extract_strided_slice %12 {offsets = [0, 1, 0], sizes = [4, 32, 32], strides = [1, 1, 1]} : vector<4x34x34xbf16> to vector<4x32x32xbf16>
    %17 = vector.extract_strided_slice %12 {offsets = [0, 1, 1], sizes = [4, 32, 32], strides = [1, 1, 1]} : vector<4x34x34xbf16> to vector<4x32x32xbf16>
    %18 = vector.extract_strided_slice %12 {offsets = [0, 1, 2], sizes = [4, 32, 32], strides = [1, 1, 1]} : vector<4x34x34xbf16> to vector<4x32x32xbf16>
    %19 = vector.extract_strided_slice %12 {offsets = [0, 2, 0], sizes = [4, 32, 32], strides = [1, 1, 1]} : vector<4x34x34xbf16> to vector<4x32x32xbf16>
    %20 = vector.extract_strided_slice %12 {offsets = [0, 2, 1], sizes = [4, 32, 32], strides = [1, 1, 1]} : vector<4x34x34xbf16> to vector<4x32x32xbf16>
    %21 = vector.extract_strided_slice %12 {offsets = [0, 2, 2], sizes = [4, 32, 32], strides = [1, 1, 1]} : vector<4x34x34xbf16> to vector<4x32x32xbf16>
    %22 = tpu.concatenate %13, %14, %15, %16, %17, %18, %19, %20, %21 in 0 : vector<4x32x32xbf16>, vector<4x32x32xbf16>, vector<4x32x32xbf16>, vector<4x32x32xbf16>, vector<4x32x32xbf16>, vector<4x32x32xbf16>, vector<4x32x32xbf16>, vector<4x32x32xbf16>, vector<4x32x32xbf16> -> vector<36x32x32xbf16>
    %23 = vector.shape_cast %22 : vector<36x32x32xbf16> to vector<36x1024xbf16>
    %c0_8 = arith.constant 0 : index
    %c0_9 = arith.constant 0 : index
    %24 = vector.load %arg5[%c0_8, %c0_9] : memref<8x36xbf16, #tpu.memory_space<vmem>>, vector<8x36xbf16>
    %cst_10 = arith.constant dense<0.000000e+00> : vector<8x1024xf32>
    %25 = tpu.matmul %24, %23, %cst_10 {dimension_numbers = #tpu.dot_dimension_numbers<[1], [0], [0], [1], [0, 0, 1, 1], [], []>} : vector<8x36xbf16>, vector<36x1024xbf16>, vector<8x1024xf32> -> vector<8x1024xf32>
    %c0_11 = arith.constant 0 : index
    %c0_12 = arith.constant 0 : index
    %26 = vector.load %arg6[%c0_11, %c0_12] : memref<8x1xf32, #tpu.memory_space<vmem>>, vector<8x1xf32>
    %27 = vector.broadcast %26 : vector<8x1xf32> to vector<8x1024xf32>
    %28 = arith.addf %25, %27 : vector<8x1024xf32>
    %cst_13 = arith.constant 0.000000e+00 : f32
    %29 = vector.broadcast %cst_13 : f32 to vector<8x1024xf32>
    %30 = arith.maximumf %28, %29 : vector<8x1024xf32>
    %c0_14 = arith.constant 0 : index
    %c0_15 = arith.constant 0 : index
    %c0_16 = arith.constant 0 : index
    %31 = vector.load %arg7[%c0_14, %c0_15, %c0_16] : memref<1x8x1024xf32, #tpu.memory_space<vmem>>, vector<1x8x1024xf32>
    %32 = vector.shape_cast %31 : vector<1x8x1024xf32> to vector<8x1024xf32>
    %33 = vector.shape_cast %30 : vector<8x1024xf32> to vector<1x8x1024xf32>
    tpu.vector_store %arg7[%c0_14, %c0_15, %c0_16], %33 {strides = array<i32>} : memref<1x8x1024xf32, #tpu.memory_space<vmem>>, vector<1x8x1024xf32>,
    return
  }
  func.func @transform_0(%arg0: i32, %arg1: i32) -> (i32, i32, i32, i32) {
    %c0_i32 = arith.constant 0 : i32
    %c0_i32_0 = arith.constant 0 : i32
    %c0_i32_1 = arith.constant 0 : i32
    %c0_i32_2 = arith.constant 0 : i32
    return %arg0, %c0_i32, %c0_i32_0, %c0_i32_1 : i32, i32, i32, i32
  }
  func.func @transform_1(%arg0: i32, %arg1: i32) -> (i32, i32) {
    %c0_i32 = arith.constant 0 : i32
    %c0_i32_0 = arith.constant 0 : i32
    %c0_i32_1 = arith.constant 0 : i32
    return %c0_i32, %c0_i32_0 : i32, i32
  }
  func.func @transform_2(%arg0: i32, %arg1: i32) -> (i32, i32, i32) {
    %c0_i32 = arith.constant 0 : i32
    %c0_i32_0 = arith.constant 0 : i32
    %c0_i32_1 = arith.constant 0 : i32
    return %arg1, %c0_i32, %c0_i32_0 : i32, i32, i32
  }
  func.func @transform_3(%arg0: i32, %arg1: i32) -> (i32, i32) {
    %c0_i32 = arith.constant 0 : i32
    %c0_i32_0 = arith.constant 0 : i32
    %c0_i32_1 = arith.constant 0 : i32
    return %c0_i32, %c0_i32_0 : i32, i32
  }
  func.func @transform_4(%arg0: i32, %arg1: i32) -> (i32, i32) {
    %c0_i32 = arith.constant 0 : i32
    %c0_i32_0 = arith.constant 0 : i32
    %c0_i32_1 = arith.constant 0 : i32
    return %c0_i32, %c0_i32_0 : i32, i32
  }
  func.func @transform_5(%arg0: i32, %arg1: i32) -> (i32, i32, i32) {
    %c0_i32 = arith.constant 0 : i32
    %c0_i32_0 = arith.constant 0 : i32
    return %arg0, %c0_i32, %arg1 : i32, i32, i32
  }
}

</mosaic_0001>

<llo_original>
// kernel: tpu_custom_call.1
$region0: #{tpu_custom_call.1}
  #allocation0 [shape = 'u32[]', space=smem, size = 0x4, offset = 0x4, fixed_abs, tag = 'smem constant byte address 0x4 - core index']
  #allocation1 [shape = 'u32[144,128]{1,0:T(1,128)}', space=vmem, size = 0x12000, scoped, tag = 'internal scratch']
  %s0 = inlined_call_operand.vmem [shape: bf16[2,18,4,16], index: 0, kind: input, shape index: {}]
  %s1 = inlined_call_operand.vmem [shape: bf16[16,34], index: 1, kind: input, shape index: {}]
  %s2 = inlined_call_operand.vmem [shape: f32[1,136,72], index: 2, kind: input, shape index: {}]
  %s3 = inlined_call_operand.vmem [shape: bf16[8,36], index: 3, kind: input, shape index: {}]
  %s4 = inlined_call_operand.vmem [shape: f32[8,1], index: 4, kind: input, shape index: {}]
  %s5 = inlined_call_operand.hbm [shape: f32[2,8,1024], index: 5, kind: output, shape index: {}]
  %s6 = sld [smem:[#allocation0]]
  $region53: #{tpu_custom_call.1} parent=0
    _
  %s8 = ssub.s32 1, %s6
  %s9 = scalar_select 0, %s8, %s6
  $region1: #{tpu_custom_call.1} parent=0
    #allocation2 [shape = 'u8[65536]{0}', space=vmem, size = 0x10000, scoped, tag = 'output window, operand 0']
    #allocation3 [shape = 's32[2]{0}', space=sflag, size = 0x8, scoped, tag = 'scoped memory for tpu_custom_call.1']
    %10 = vsyncpa [#allocation3], 0
    %s11 = scalar_lea.sflag [#allocation3], 1
    %12 = vsyncpa %s11, 0
    loop: start=0, step=1, limit=4
    $region2: #{tpu_custom_call.1} parent=1 // loop_pre_header
      _
    $region3: #{tpu_custom_call.1} parent=1 // loop_header
      %s14 = sphi 0, %s18
      %p15 = scmp.ge.s32.totalorder %s14, 4
      %s21 = sphi 0, %s33
      %s22 = sphi 0, %s29
      %s23 = sphi 0, %s21
      %s24 = sphi 0, %s22
      %s25 = sphi 0, %s23
      %s26 = sphi 0, %s24
      %s36 = sphi 0, %s38
      %s39 = sphi 0, %s36
      %s40 = sphi 0, %s39
      %s56 = sphi 0, %s40
      %s60 = sphi 0, %s60
      %s62 = sphi 0, %s60
      %s63 = sphi 0, %s62
      %s77 = sphi 0, %s63
      %s83 = sphi 0, %s85
      %s86 = sphi 0, %s83
      %s87 = sphi 0, %s86
      %s103 = sphi 0, %s87
      %s107 = sphi 0, %s107
      %s109 = sphi 0, %s107
      %s110 = sphi 0, %s109
      %s124 = sphi 0, %s110
      %s128 = sphi 0, %s128
      %s130 = sphi 0, %s128
      %s131 = sphi 0, %s130
      %s145 = sphi 0, %s131
      %s153 = sphi 0, %s155
      %s156 = sphi 0, %s153
      %s157 = sphi 0, %s156
      %s173 = sphi 0, %s157
    $region4: #{tpu_custom_call.1} parent=1 // loop_header_branch
      %17 = sbr.rel (%p15) target = $region8
    $region5: #{tpu_custom_call.1} parent=1 // loop_body
      %s19 = ssub.s32 %s14, 1
      %s20 = ssub.s32 %s14, 2
      %s27 = sadd.s32 1, %s22
      %p28 = scmp.ge.s32.totalorder %s27, 1
      %s29 = scalar_select %p28, 0, %s27
      %s30 = sadd.s32 1, %s21
      %s31 = scalar_select %p28, %s30, %s21
      %p32 = scmp.ge.s32.totalorder %s31, 2
      %s33 = scalar_select %p32, 0, %s31
      %s34 = ssub.s32 %s21, %s33
      %p35 = scmp.eq.s32.totalorder %s34, 0
      %s37 = sadd.s32 %s36, 1
      %s38 = scalar_select %p35, %s36, %s37
      %p41 = pneg %p35
      %p42 = scmp.eq.s32.totalorder %s14, 1
      %p43 = por %p41, %p42
      %p44 = scmp.ne.s32.totalorder %s36, %s39
      %p45 = scmp.eq.s32.totalorder %s14, 0
      %p46 = por %p44, %p45
      %p47 = scmp.ne.s32.totalorder %s36, %s39
      %p48 = scmp.eq.s32.totalorder %s19, 1
      %p49 = por %p47, %p48
      %p50 = scmp.ne.s32.totalorder %s39, %s40
      %p51 = scmp.eq.s32.totalorder %s19, 0
      %p52 = por %p50, %p51
      %p53 = scmp.ne.s32.totalorder %s39, %s40
      %p54 = scmp.eq.s32.totalorder %s20, 1
      %p55 = por %p53, %p54
      %p57 = scmp.ne.s32.totalorder %s40, %s56
      %p58 = scmp.eq.s32.totalorder %s20, 0
      %p59 = por %p57, %p58
      %s61 = sadd.s32 %s60, 1
      %p64 = scmp.eq.s32.totalorder %s14, 1
      %p65 = scmp.ne.s32.totalorder %s60, %s62
      %p66 = scmp.eq.s32.totalorder %s14, 0
      %p67 = por %p65, %p66
      %p68 = scmp.ne.s32.totalorder %s60, %s62
      %p69 = scmp.eq.s32.totalorder %s19, 1
      %p70 = por %p68, %p69
      %p71 = scmp.ne.s32.totalorder %s62, %s63
      %p72 = scmp.eq.s32.totalorder %s19, 0
      %p73 = por %p71, %p72
      %p74 = scmp.ne.s32.totalorder %s62, %s63
      %p75 = scmp.eq.s32.totalorder %s20, 1
      %p76 = por %p74, %p75
      %p78 = scmp.ne.s32.totalorder %s63, %s77
      %p79 = scmp.eq.s32.totalorder %s20, 0
      %p80 = por %p78, %p79
      %s81 = ssub.s32 %s22, %s29
      %p82 = scmp.eq.s32.totalorder %s81, 0
      %s84 = sadd.s32 %s83, 1
      %s85 = scalar_select %p82, %s83, %s84
      %p88 = pneg %p82
      %p89 = scmp.eq.s32.totalorder %s14, 1
      %p90 = por %p88, %p89
      %p91 = scmp.ne.s32.totalorder %s83, %s86
      %p92 = scmp.eq.s32.totalorder %s14, 0
      %p93 = por %p91, %p92
      %p94 = scmp.ne.s32.totalorder %s83, %s86
      %p95 = scmp.eq.s32.totalorder %s19, 1
      %p96 = por %p94, %p95
      %p97 = scmp.ne.s32.totalorder %s86, %s87
      %p98 = scmp.eq.s32.totalorder %s19, 0
      %p99 = por %p97, %p98
      %p100 = scmp.ne.s32.totalorder %s86, %s87
      %p101 = scmp.eq.s32.totalorder %s20, 1
      %p102 = por %p100, %p101
      %p104 = scmp.ne.s32.totalorder %s87, %s103
      %p105 = scmp.eq.s32.totalorder %s20, 0
      %p106 = por %p104, %p105
      %s108 = sadd.s32 %s107, 1
      %p111 = scmp.eq.s32.totalorder %s14, 1
      %p112 = scmp.ne.s32.totalorder %s107, %s109
      %p113 = scmp.eq.s32.totalorder %s14, 0
      %p114 = por %p112, %p113
      %p115 = scmp.ne.s32.totalorder %s107, %s109
      %p116 = scmp.eq.s32.totalorder %s19, 1
      %p117 = por %p115, %p116
      %p118 = scmp.ne.s32.totalorder %s109, %s110
      %p119 = scmp.eq.s32.totalorder %s19, 0
      %p120 = por %p118, %p119
      %p121 = scmp.ne.s32.totalorder %s109, %s110
      %p122 = scmp.eq.s32.totalorder %s20, 1
      %p123 = por %p121, %p122
      %p125 = scmp.ne.s32.totalorder %s110, %s124
      %p126 = scmp.eq.s32.totalorder %s20, 0
      %p127 = por %p125, %p126
      %s129 = sadd.s32 %s128, 1
      %p132 = scmp.eq.s32.totalorder %s14, 1
      %p133 = scmp.ne.s32.totalorder %s128, %s130
      %p134 = scmp.eq.s32.totalorder %s14, 0
      %p135 = por %p133, %p134
      %p136 = scmp.ne.s32.totalorder %s128, %s130
      %p137 = scmp.eq.s32.totalorder %s19, 1
      %p138 = por %p136, %p137
      %p139 = scmp.ne.s32.totalorder %s130, %s131
      %p140 = scmp.eq.s32.totalorder %s19, 0
      %p141 = por %p139, %p140
      %p142 = scmp.ne.s32.totalorder %s130, %s131
      %p143 = scmp.eq.s32.totalorder %s20, 1
      %p144 = por %p142, %p143
      %p146 = scmp.ne.s32.totalorder %s131, %s145
      %p147 = scmp.eq.s32.totalorder %s20, 0
      %p148 = por %p146, %p147
      %s149 = ssub.s32 %s21, %s33
      %s150 = ssub.s32 %s22, %s29
      %s151 = sor.u32 %s149, %s150
      %p152 = scmp.eq.s32.totalorder %s151, 0
      %s154 = sadd.s32 %s153, 1
      %s155 = scalar_select %p152, %s153, %s154
      %p158 = pneg %p152
      %p159 = scmp.eq.s32.totalorder %s14, 1
      %p160 = por %p158, %p159
      %p161 = scmp.ne.s32.totalorder %s153, %s156
      %p162 = scmp.eq.s32.totalorder %s14, 0
      %p163 = por %p161, %p162
      %p164 = scmp.ne.s32.totalorder %s153, %s156
      %p165 = scmp.eq.s32.totalorder %s19, 1
      %p166 = por %p164, %p165
      %p167 = scmp.ne.s32.totalorder %s156, %s157
      %p168 = scmp.eq.s32.totalorder %s19, 0
      %p169 = por %p167, %p168
      %p170 = scmp.ne.s32.totalorder %s156, %s157
      %p171 = scmp.eq.s32.totalorder %s20, 1
      %p172 = por %p170, %p171
      %p174 = scmp.ne.s32.totalorder %s157, %s173
      %p175 = scmp.eq.s32.totalorder %s20, 0
      %p176 = por %p174, %p175
      %p177 = scmp.le.s32.totalorder 1, %s14
      %p178 = scmp.lt.s32.totalorder %s14, 3
      %p179 = pnand %p177, %p178
      %p180 = pneg %p179
      // Predicated region
      $region9: #{tpu_custom_call.1} parent=5 // pred_check
        _
      $region10: #{tpu_custom_call.1} parent=5 // pred_check_branch
        %182 = sbr.rel (%p179) target = $region12
      $region11: #{tpu_custom_call.1} parent=5 // pred_region
        %s183 = ssub.s32 %s14, 1
        // Predicated region
        $region13: #{tpu_custom_call.1} parent=11 // pred_check
          %p184 = pneg %p73
        $region14: #{tpu_custom_call.1} parent=11 // pred_check_branch
          %186 = sbr.rel (%p184) target = $region16
        $region15: #{tpu_custom_call.1} parent=11 // pred_region
          _
        $region16: #{tpu_custom_call.1} parent=11 // pred_fallthru
          _
        // Predicated region
        $region17: #{tpu_custom_call.1} parent=11 // pred_check
          %p187 = pneg %p99
        $region18: #{tpu_custom_call.1} parent=11 // pred_check_branch
          %189 = sbr.rel (%p187) target = $region20
        $region19: #{tpu_custom_call.1} parent=11 // pred_region
          %p190 = scmp.lt.s32.totalorder %s24, 0
          %s191 = scalar_select %p190, %s24, 0
          %s192 = smul.addr %s191, 17
          %s193 = smul.addr %s192, 8
          %s194 = scalar_lea.vmem %s2, %s193
        $region20: #{tpu_custom_call.1} parent=11 // pred_fallthru
          _
        // Predicated region
        $region21: #{tpu_custom_call.1} parent=11 // pred_check
          %p195 = pneg %p120
        $region22: #{tpu_custom_call.1} parent=11 // pred_check_branch
          %197 = sbr.rel (%p195) target = $region24
        $region23: #{tpu_custom_call.1} parent=11 // pred_region
          _
        $region24: #{tpu_custom_call.1} parent=11 // pred_fallthru
          _
        // Predicated region
        $region25: #{tpu_custom_call.1} parent=11 // pred_check
          %p198 = pneg %p141
        $region26: #{tpu_custom_call.1} parent=11 // pred_check_branch
          %200 = sbr.rel (%p198) target = $region28
        $region27: #{tpu_custom_call.1} parent=11 // pred_region
          _
        $region28: #{tpu_custom_call.1} parent=11 // pred_fallthru
          _
      $region12: #{tpu_custom_call.1} parent=5 // pred_fallthru
        _
      %p201 = scmp.lt.s32.totalorder %s14, 2
      // Predicated region
      $region29: #{tpu_custom_call.1} parent=5 // pred_check
        %p202 = pneg %p201
      $region30: #{tpu_custom_call.1} parent=5 // pred_check_branch
        %204 = sbr.rel (%p202) target = $region32
      $region31: #{tpu_custom_call.1} parent=5 // pred_region
        // Predicated region
        $region33: #{tpu_custom_call.1} parent=31 // pred_check
          %p205 = pneg %p46
        $region34: #{tpu_custom_call.1} parent=31 // pred_check_branch
          %207 = sbr.rel (%p205) target = $region36
        $region35: #{tpu_custom_call.1} parent=31 // pred_region
          %p208 = scmp.lt.s32.totalorder %s21, 1
          %s209 = scalar_select %p208, %s21, 1
          %s210 = smul.addr %s209, 18
          %s211 = smul.addr %s210, 2
          %s212 = scalar_lea.vmem %s0, %s211
        $region36: #{tpu_custom_call.1} parent=31 // pred_fallthru
          _
      $region32: #{tpu_custom_call.1} parent=5 // pred_fallthru
        _
      %p213 = scmp.le.s32.totalorder 1, %s14
      %p214 = scmp.lt.s32.totalorder %s14, 3
      %p215 = pnand %p213, %p214
      %p216 = pneg %p215
      // Predicated region
      $region37: #{tpu_custom_call.1} parent=5 // pred_check
        _
      $region38: #{tpu_custom_call.1} parent=5 // pred_check_branch
        %218 = sbr.rel (%p215) target = $region40
      $region39: #{tpu_custom_call.1} parent=5 // pred_region
        %s219 = ssub.s32 %s14, 1
        %p220 = scmp.lt.s32.totalorder %s23, 1
        %s221 = scalar_select %p220, %s23, 1
        %s222 = smul.addr %s221, 18
        %s223 = smul.addr %s222, 2
        %s224 = scalar_lea.vmem %s0, %s223
        %p225 = pneg %p52
        %p226 = pneg %p49
        %p227 = pneg %p73
        %p228 = pneg %p70
        %p229 = scmp.lt.s32.totalorder %s24, 0
        %s230 = scalar_select %p229, %s24, 0
        %s231 = smul.addr %s230, 17
        %s232 = smul.addr %s231, 8
        %s233 = scalar_lea.vmem %s2, %s232
        %p234 = pneg %p99
        %p235 = pneg %p96
        %p236 = pneg %p120
        %p237 = pneg %p117
        %p238 = pneg %p141
        %p239 = pneg %p138
        %p240 = pneg %p169
        %p241 = pneg %p166
        %s242 = sand.u32 %s156, 1
        %s243 = scalar_lea.sflag [#allocation3], %s242
        %s244 = sand.u32 %s156, 1
        %s245 = smul.addr %s244, 64
        %s246 = scalar_lea.vmem [#allocation2], %s245
        %p247 = scmp.lt.s32.totalorder %s23, 1
        %s248 = scalar_select %p247, %s23, 1
        %s249 = smul.addr %s248, 18
        %s250 = smul.addr %s249, 2
        %s251 = scalar_lea.vmem %s0, %s250
        %p252 = scmp.lt.s32.totalorder %s24, 0
        %s253 = scalar_select %p252, %s24, 0
        %s254 = smul.addr %s253, 17
        %s255 = smul.addr %s254, 8
        %s256 = scalar_lea.vmem %s2, %s255
        %s257 = smul.u32 8, %s24
        %s259 = smul.u32 %s24, 16
        %s260 = smul.addr %s259, 2
        %s261 = scalar_lea.vmem %s251, %s260
        %v262 = vld [vmem:[%s261] sm:$0x3]
        %v263 = vld [vmem:[%s261 + $0x2] sm:$0x3]
        %v264 = vld [vmem:[%s261 + $0x4] sm:$0x3]
        %v265 = vld [vmem:[%s261 + $0x6] sm:$0x3]
        %v266 = vld [vmem:[%s261 + $0x8] sm:$0x3]
        %v267 = vld [vmem:[%s261 + $0xa] sm:$0x3]
        %v268 = vld [vmem:[%s261 + $0xc] sm:$0x3]
        %v269 = vld [vmem:[%s261 + $0xe] sm:$0x3]
        %v270 = vld [vmem:[%s261 + $0x10] sm:$0x3]
        %v271 = vld [vmem:[%s261 + $0x12] sm:$0x3]
        %v272 = vld [vmem:[%s261 + $0x14] sm:$0x3]
        %v273 = vld [vmem:[%s261 + $0x16] sm:$0x3]
        %v274 = vld [vmem:[%s261 + $0x18] sm:$0x3]
        %v275 = vld [vmem:[%s261 + $0x1a] sm:$0x3]
        %v276 = vld [vmem:[%s261 + $0x1c] sm:$0x3]
        %v277 = vld [vmem:[%s261 + $0x1e] sm:$0x3]
        %v278 = vld [vmem:[%s261 + $0x20] sm:$0x3]
        %v279 = vld [vmem:[%s261 + $0x22] sm:$0x3]
        %v280 = vld [vmem:[%s1] sm:$0xf]
        %v281 = vld [vmem:[%s1 + $0x4] sm:$0xf]
        %v300 = vcombine.low %v262, %v263
        %v301 = vcombine.low %v264, %v265
        %v303 = vunpack.c.l.s4 1983009808
        %v304 = vunpack.c.0.s8 %v303
        %v305 = vlaneseq
        %v306 = vshrl.u32 %v305, 7
        %v307 = vsub.s32 %v304, %v306
        %v308 = vrot.slane %v300, %v307
        %v310 = vunpack.c.l.s4 1983009808
        %v311 = vunpack.c.0.s8 %v310
        %v312 = vlaneseq
        %v313 = vshrl.u32 %v312, 7
        %v314 = vsub.s32 %v311, %v313
        %v315 = vrot.slane %v301, %v314
        %v316 = vcombine.low %v308, %v315
        %v317 = vcombine.low %v266, %v267
        %v318 = vcombine.low %v268, %v269
        %v320 = vunpack.c.l.s4 1983009808
        %v321 = vunpack.c.0.s8 %v320
        %v322 = vlaneseq
        %v323 = vshrl.u32 %v322, 7
        %v324 = vsub.s32 %v321, %v323
        %v325 = vrot.slane %v317, %v324
        %v327 = vunpack.c.l.s4 1983009808
        %v328 = vunpack.c.0.s8 %v327
        %v329 = vlaneseq
        %v330 = vshrl.u32 %v329, 7
        %v331 = vsub.s32 %v328, %v330
        %v332 = vrot.slane %v318, %v331
        %v333 = vcombine.low %v325, %v332
        %v334 = vcombine.low %v270, %v271
        %v335 = vcombine.low %v272, %v273
        %v337 = vunpack.c.l.s4 1983009808
        %v338 = vunpack.c.0.s8 %v337
        %v339 = vlaneseq
        %v340 = vshrl.u32 %v339, 7
        %v341 = vsub.s32 %v338, %v340
        %v342 = vrot.slane %v334, %v341
        %v344 = vunpack.c.l.s4 1983009808
        %v345 = vunpack.c.0.s8 %v344
        %v346 = vlaneseq
        %v347 = vshrl.u32 %v346, 7
        %v348 = vsub.s32 %v345, %v347
        %v349 = vrot.slane %v335, %v348
        %v350 = vcombine.low %v342, %v349
        %v351 = vcombine.low %v274, %v275
        %v352 = vcombine.low %v276, %v277
        %v354 = vunpack.c.l.s4 1983009808
        %v355 = vunpack.c.0.s8 %v354
        %v356 = vlaneseq
        %v357 = vshrl.u32 %v356, 7
        %v358 = vsub.s32 %v355, %v357
        %v359 = vrot.slane %v351, %v358
        %v361 = vunpack.c.l.s4 1983009808
        %v362 = vunpack.c.0.s8 %v361
        %v363 = vlaneseq
        %v364 = vshrl.u32 %v363, 7
        %v365 = vsub.s32 %v362, %v364
        %v366 = vrot.slane %v352, %v365
        %v367 = vcombine.low %v359, %v366
        %v368 = vcombine.low %v278, %v279
        %v370 = vunpack.c.l.s4 1983009808
        %v371 = vunpack.c.0.s8 %v370
        %v372 = vlaneseq
        %v373 = vshrl.u32 %v372, 7
        %v374 = vsub.s32 %v371, %v373
        %v375 = vrot.slane %v368, %v374
        %v378 = vunpack.c.l.b16 %v280
        %v379 = vunpack.c.l.b16 %v281
        %v380 = vpack.c.b16 %v379, %v378
        %vm382 = vcmask 130048
        %v384 = vsel %vm382, %v316, 0
        %v387 = vsel %vm382, %v333, 0
        %v390 = vsel %vm382, %v350, 0
        %v393 = vsel %vm382, %v367, 0
        %v396 = vsel %vm382, %v375, 0
        %398 = vmatprep.subr.bf16.mxu0 0
        %399 = vmatpush1.bf16.msra.mxu0 %v380
        %400 = vmatprep.subr.bf16.mxu0 0
        %401 = vmatpush1.bf16.msra.mxu0 0
        %402 = vmatprep.subr.bf16.mxu0 0
        %403 = vmatpush1.bf16.msra.mxu0 0
        %404 = vmatprep.subr.bf16.mxu0 0
        %405 = vmatpush1.bf16.msra.mxu0 0
        %406 = vmatprep.subr.bf16.mxu0 0
        %407 = vmatpush1.bf16.msra.mxu0 0
        %408 = vmatprep.subr.bf16.mxu0 0
        %409 = vmatpush1.bf16.msra.mxu0 0
        %410 = vmatprep.subr.bf16.mxu0 0
        %411 = vmatpush1.bf16.msra.mxu0 0
        %412 = vmatprep.subr.bf16.mxu0 0
        %413 = vmatpush1.bf16.msra.mxu0 0
        %414 = vmatprep.subr.bf16.mxu0 0
        %415 = vmatpush1.bf16.msra.mxu0 0
        %416 = vmatprep.subr.bf16.mxu0 0
        %417 = vmatpush1.bf16.msra.mxu0 0
        %418 = vmatprep.subr.bf16.mxu0 0
        %419 = vmatpush1.bf16.msra.mxu0 0
        %420 = vmatprep.subr.bf16.mxu0 0
        %421 = vmatpush1.bf16.msra.mxu0 0
        %422 = vmatprep.subr.bf16.mxu0 0
        %423 = vmatpush1.bf16.msra.mxu0 0
        %424 = vmatprep.subr.bf16.mxu0 0
        %425 = vmatpush1.bf16.msra.mxu0 0
        %426 = vmatprep.subr.bf16.mxu0 0
        %427 = vmatpush1.bf16.msra.mxu0 0
        %428 = vmatprep.subr.bf16.mxu0 0
        %429 = vmatpush1.bf16.msra.mxu0 0
        %430 = vmatprep.mubr.bf16.mxu0 0
        %431 = vmatmul.mubr.bf16.gmra.mrb[0].mxu0 %v384
        %v432 = vpop.f32.mrb[0].mxu0
        %v433 = vadd.f32 0.0, %v432
        %v434 = vpop.f32.mrb[0].mxu0
        %v435 = vpop.f32.mrb[0].mxu0
        %v436 = vadd.f32 0.0, %v435
        %v437 = vpop.f32.mrb[0].mxu0
        %438 = vmatprep.mubr.bf16.mxu0 0
        %439 = vmatmul.mubr.bf16.gmra.mrb[0].mxu0 %v387
        %v440 = vpop.f32.mrb[0].mxu0
        %v441 = vadd.f32 0.0, %v440
        %v442 = vpop.f32.mrb[0].mxu0
        %v443 = vpop.f32.mrb[0].mxu0
        %v444 = vadd.f32 0.0, %v443
        %v445 = vpop.f32.mrb[0].mxu0
        %446 = vmatprep.mubr.bf16.mxu0 0
        %447 = vmatmul.mubr.bf16.gmra.mrb[0].mxu0 %v390
        %v448 = vpop.f32.mrb[0].mxu0
        %v449 = vadd.f32 0.0, %v448
        %v450 = vpop.f32.mrb[0].mxu0
        %v451 = vpop.f32.mrb[0].mxu0
        %v452 = vadd.f32 0.0, %v451
        %v453 = vpop.f32.mrb[0].mxu0
        %454 = vmatprep.mubr.bf16.mxu0 0
        %455 = vmatmul.mubr.bf16.gmra.mrb[0].mxu0 %v393
        %v456 = vpop.f32.mrb[0].mxu0
        %v457 = vadd.f32 0.0, %v456
        %v458 = vpop.f32.mrb[0].mxu0
        %v459 = vpop.f32.mrb[0].mxu0
        %v460 = vadd.f32 0.0, %v459
        %v461 = vpop.f32.mrb[0].mxu0
        %462 = vmatprep.mubr.bf16.mxu0 0
        %463 = vmatmul.mubr.bf16.gmra.mrb[0].mxu0 %v396
        %v464 = vpop.f32.mrb[0].mxu0
        %v465 = vadd.f32 0.0, %v464
        %v466 = vpop.f32.mrb[0].mxu0
        %v467 = vpop.f32.mrb[0].mxu0
        %v468 = vpop.f32.mrb[0].mxu0
        %469 = vdwg.mxu0
        %v470 = vld [vmem:[%s256] sm:$0xff]
        %v471 = vld [vmem:[%s256 + $0x8] sm:$0xff]
        %v472 = vld [vmem:[%s256 + $0x10] sm:$0xff]
        %v473 = vld [vmem:[%s256 + $0x18] sm:$0xff]
        %v474 = vld [vmem:[%s256 + $0x20] sm:$0xff]
        %v475 = vld [vmem:[%s256 + $0x28] sm:$0xff]
        %v476 = vld [vmem:[%s256 + $0x30] sm:$0xff]
        %v477 = vld [vmem:[%s256 + $0x38] sm:$0xff]
        %v478 = vld [vmem:[%s256 + $0x40] sm:$0xff]
        %v479 = vld [vmem:[%s256 + $0x48] sm:$0xff]
        %v480 = vld [vmem:[%s256 + $0x50] sm:$0xff]
        %v481 = vld [vmem:[%s256 + $0x58] sm:$0xff]
        %v482 = vld [vmem:[%s256 + $0x60] sm:$0xff]
        %v483 = vld [vmem:[%s256 + $0x68] sm:$0xff]
        %v484 = vld [vmem:[%s256 + $0x70] sm:$0xff]
        %v485 = vld [vmem:[%s256 + $0x78] sm:$0xff]
        %v486 = vld [vmem:[%s256 + $0x80] sm:$0xff]
        %vm487 = vcmask 588800
        %v489 = vsel %vm487, %v470, 0
        %v492 = vsel %vm487, %v471, 0
        %v495 = vsel %vm487, %v472, 0
        %v498 = vsel %vm487, %v473, 0
        %v501 = vsel %vm487, %v474, 0
        %v504 = vsel %vm487, %v475, 0
        %v507 = vsel %vm487, %v476, 0
        %v510 = vsel %vm487, %v477, 0
        %v513 = vsel %vm487, %v478, 0
        %v516 = vsel %vm487, %v479, 0
        %v519 = vsel %vm487, %v480, 0
        %v522 = vsel %vm487, %v481, 0
        %v525 = vsel %vm487, %v482, 0
        %v528 = vsel %vm487, %v483, 0
        %v531 = vsel %vm487, %v484, 0
        %v534 = vsel %vm487, %v485, 0
        %v537 = vsel %vm487, %v486, 0
        %539 = vmatprep.subr.mxu0 0.0
        %540 = vmatpush1.msra.mxu0 %v433
        %541 = vmatprep.subr.mxu0 0.0
        %542 = vmatpush1.msra.mxu0 %v436
        %543 = vmatprep.subr.mxu0 0.0
        %544 = vmatpush1.msra.mxu0 %v441
        %545 = vmatprep.subr.mxu0 0.0
        %546 = vmatpush1.msra.mxu0 %v444
        %547 = vmatprep.subr.mxu0 0.0
        %548 = vmatpush1.msra.mxu0 %v449
        %549 = vmatprep.subr.mxu0 0.0
        %550 = vmatpush1.msra.mxu0 %v452
        %551 = vmatprep.subr.mxu0 0.0
        %552 = vmatpush1.msra.mxu0 %v457
        %553 = vmatprep.subr.mxu0 0.0
        %554 = vmatpush1.msra.mxu0 %v460
        %555 = vmatprep.subr.mxu0 0.0
        %556 = vmatpush1.msra.mxu0 %v465
        %557 = vmatprep.subr.mxu0 0.0
        %558 = vmatpush1.msra.mxu0 0.0
        %559 = vmatprep.subr.mxu0 0.0
        %560 = vmatpush1.msra.mxu0 0.0
        %561 = vmatprep.subr.mxu0 0.0
        %562 = vmatpush1.msra.mxu0 0.0
        %563 = vmatprep.subr.mxu0 0.0
        %564 = vmatpush1.msra.mxu0 0.0
        %565 = vmatprep.subr.mxu0 0.0
        %566 = vmatpush1.msra.mxu0 0.0
        %567 = vmatprep.subr.mxu0 0.0
        %568 = vmatpush1.msra.mxu0 0.0
        %569 = vmatprep.subr.mxu0 0.0
        %570 = vmatpush1.msra.mxu0 0.0
        %571 = vmatprep.subr.mxu0 0.0
        %572 = vmatpush1.msra.mxu0 0.0
        %573 = vmatprep.subr.mxu0 0.0
        %574 = vmatpush1.msra.mxu0 0.0
        %575 = vmatprep.subr.mxu0 0.0
        %576 = vmatpush1.msra.mxu0 0.0
        %577 = vmatprep.subr.mxu0 0.0
        %578 = vmatpush1.msra.mxu0 0.0
        %579 = vmatprep.subr.mxu0 0.0
        %580 = vmatpush1.msra.mxu0 0.0
        %581 = vmatprep.subr.mxu0 0.0
        %582 = vmatpush1.msra.mxu0 0.0
        %583 = vmatprep.subr.mxu0 0.0
        %584 = vmatpush1.msra.mxu0 0.0
        %585 = vmatprep.subr.mxu0 0.0
        %586 = vmatpush1.msra.mxu0 0.0
        %587 = vmatprep.subr.mxu0 0.0
        %588 = vmatpush1.msra.mxu0 0.0
        %589 = vmatprep.subr.mxu0 0.0
        %590 = vmatpush1.msra.mxu0 0.0
        %591 = vmatprep.subr.mxu0 0.0
        %592 = vmatpush1.msra.mxu0 0.0
        %593 = vmatprep.subr.mxu0 0.0
        %594 = vmatpush1.msra.mxu0 0.0
        %595 = vmatprep.subr.mxu0 0.0
        %596 = vmatpush1.msra.mxu0 0.0
        %597 = vmatprep.subr.mxu0 0.0
        %598 = vmatpush1.msra.mxu0 0.0
        %599 = vmatprep.subr.mxu0 0.0
        %600 = vmatpush1.msra.mxu0 0.0
        %601 = vmatprep.subr.mxu0 0.0
        %602 = vmatpush1.msra.mxu0 0.0
        %603 = vmatprep.mubr.f32.mxu0 0.0
        %604 = vmatmul.mubr.f32.gmra.mrb[0].mxu0 %v489
        %v605 = vpop.f32.mrb[0].mxu0
        %v606 = vadd.f32 0.0, %v605
        %v607 = vpop.f32.mrb[0].mxu0
        %608 = vmatprep.mubr.f32.mxu0 0.0
        %609 = vmatmul.mubr.f32.gmra.mrb[0].mxu0 %v492
        %v610 = vpop.f32.mrb[0].mxu0
        %v611 = vadd.f32 0.0, %v610
        %v612 = vpop.f32.mrb[0].mxu0
        %613 = vmatprep.mubr.f32.mxu0 0.0
        %614 = vmatmul.mubr.f32.gmra.mrb[0].mxu0 %v495
        %v615 = vpop.f32.mrb[0].mxu0
        %v616 = vadd.f32 0.0, %v615
        %v617 = vpop.f32.mrb[0].mxu0
        %618 = vmatprep.mubr.f32.mxu0 0.0
        %619 = vmatmul.mubr.f32.gmra.mrb[0].mxu0 %v498
        %v620 = vpop.f32.mrb[0].mxu0
        %v621 = vadd.f32 0.0, %v620
        %v622 = vpop.f32.mrb[0].mxu0
        %623 = vmatprep.mubr.f32.mxu0 0.0
        %624 = vmatmul.mubr.f32.gmra.mrb[0].mxu0 %v501
        %v625 = vpop.f32.mrb[0].mxu0
        %v626 = vadd.f32 0.0, %v625
        %v627 = vpop.f32.mrb[0].mxu0
        %628 = vmatprep.mubr.f32.mxu0 0.0
        %629 = vmatmul.mubr.f32.gmra.mrb[0].mxu0 %v504
        %v630 = vpop.f32.mrb[0].mxu0
        %v631 = vadd.f32 0.0, %v630
        %v632 = vpop.f32.mrb[0].mxu0
        %633 = vmatprep.mubr.f32.mxu0 0.0
        %634 = vmatmul.mubr.f32.gmra.mrb[0].mxu0 %v507
        %v635 = vpop.f32.mrb[0].mxu0
        %v636 = vadd.f32 0.0, %v635
        %v637 = vpop.f32.mrb[0].mxu0
        %638 = vmatprep.mubr.f32.mxu0 0.0
        %639 = vmatmul.mubr.f32.gmra.mrb[0].mxu0 %v510
        %v640 = vpop.f32.mrb[0].mxu0
        %v641 = vadd.f32 0.0, %v640
        %v642 = vpop.f32.mrb[0].mxu0
        %643 = vmatprep.mubr.f32.mxu0 0.0
        %644 = vmatmul.mubr.f32.gmra.mrb[0].mxu0 %v513
        %v645 = vpop.f32.mrb[0].mxu0
        %v646 = vadd.f32 0.0, %v645
        %v647 = vpop.f32.mrb[0].mxu0
        %648 = vmatprep.mubr.f32.mxu0 0.0
        %649 = vmatmul.mubr.f32.gmra.mrb[0].mxu0 %v516
        %v650 = vpop.f32.mrb[0].mxu0
        %v651 = vadd.f32 0.0, %v650
        %v652 = vpop.f32.mrb[0].mxu0
        %653 = vmatprep.mubr.f32.mxu0 0.0
        %654 = vmatmul.mubr.f32.gmra.mrb[0].mxu0 %v519
        %v655 = vpop.f32.mrb[0].mxu0
        %v656 = vadd.f32 0.0, %v655
        %v657 = vpop.f32.mrb[0].mxu0
        %658 = vmatprep.mubr.f32.mxu0 0.0
        %659 = vmatmul.mubr.f32.gmra.mrb[0].mxu0 %v522
        %v660 = vpop.f32.mrb[0].mxu0
        %v661 = vadd.f32 0.0, %v660
        %v662 = vpop.f32.mrb[0].mxu0
        %663 = vmatprep.mubr.f32.mxu0 0.0
        %664 = vmatmul.mubr.f32.gmra.mrb[0].mxu0 %v525
        %v665 = vpop.f32.mrb[0].mxu0
        %v666 = vadd.f32 0.0, %v665
        %v667 = vpop.f32.mrb[0].mxu0
        %668 = vmatprep.mubr.f32.mxu0 0.0
        %669 = vmatmul.mubr.f32.gmra.mrb[0].mxu0 %v528
        %v670 = vpop.f32.mrb[0].mxu0
        %v671 = vadd.f32 0.0, %v670
        %v672 = vpop.f32.mrb[0].mxu0
        %673 = vmatprep.mubr.f32.mxu0 0.0
        %674 = vmatmul.mubr.f32.gmra.mrb[0].mxu0 %v531
        %v675 = vpop.f32.mrb[0].mxu0
        %v676 = vadd.f32 0.0, %v675
        %v677 = vpop.f32.mrb[0].mxu0
        %678 = vmatprep.mubr.f32.mxu0 0.0
        %679 = vmatmul.mubr.f32.gmra.mrb[0].mxu0 %v534
        %v680 = vpop.f32.mrb[0].mxu0
        %v681 = vadd.f32 0.0, %v680
        %v682 = vpop.f32.mrb[0].mxu0
        %683 = vmatprep.mubr.f32.mxu0 0.0
        %684 = vmatmul.mubr.f32.gmra.mrb[0].mxu0 %v537
        %v685 = vpop.f32.mrb[0].mxu0
        %v686 = vadd.f32 0.0, %v685
        %v687 = vpop.f32.mrb[0].mxu0
        %688 = vdwg.mxu0
        %v706 = vcombine.high %v606, %v606
        %v708 = vunpack.c.l.s4 1983009808
        %v709 = vunpack.c.0.s8 %v708
        %v710 = vlaneseq
        %v711 = vshrl.u32 %v710, 7
        %v712 = vsub.s32 %v709, %v711
        %v713 = vrot.slane %v606, %v712
        %v715 = vunpack.c.l.s4 1983009808
        %v716 = vunpack.c.0.s8 %v715
        %v717 = vlaneseq
        %v718 = vshrl.u32 %v717, 7
        %v719 = vsub.s32 %v716, %v718
        %v720 = vrot.slane %v706, %v719
        %v721 = vcombine.high %v713, %v713
        %v722 = vcombine.high %v720, %v720
        %v723 = vcombine.high %v611, %v611
        %v725 = vunpack.c.l.s4 1983009808
        %v726 = vunpack.c.0.s8 %v725
        %v727 = vlaneseq
        %v728 = vshrl.u32 %v727, 7
        %v729 = vsub.s32 %v726, %v728
        %v730 = vrot.slane %v611, %v729
        %v732 = vunpack.c.l.s4 1983009808
        %v733 = vunpack.c.0.s8 %v732
        %v734 = vlaneseq
        %v735 = vshrl.u32 %v734, 7
        %v736 = vsub.s32 %v733, %v735
        %v737 = vrot.slane %v723, %v736
        %v738 = vcombine.high %v730, %v730
        %v739 = vcombine.high %v737, %v737
        %v740 = vcombine.high %v616, %v616
        %v742 = vunpack.c.l.s4 1983009808
        %v743 = vunpack.c.0.s8 %v742
        %v744 = vlaneseq
        %v745 = vshrl.u32 %v744, 7
        %v746 = vsub.s32 %v743, %v745
        %v747 = vrot.slane %v616, %v746
        %v749 = vunpack.c.l.s4 1983009808
        %v750 = vunpack.c.0.s8 %v749
        %v751 = vlaneseq
        %v752 = vshrl.u32 %v751, 7
        %v753 = vsub.s32 %v750, %v752
        %v754 = vrot.slane %v740, %v753
        %v755 = vcombine.high %v747, %v747
        %v756 = vcombine.high %v754, %v754
        %v757 = vcombine.high %v621, %v621
        %v759 = vunpack.c.l.s4 1983009808
        %v760 = vunpack.c.0.s8 %v759
        %v761 = vlaneseq
        %v762 = vshrl.u32 %v761, 7
        %v763 = vsub.s32 %v760, %v762
        %v764 = vrot.slane %v621, %v763
        %v766 = vunpack.c.l.s4 1983009808
        %v767 = vunpack.c.0.s8 %v766
        %v768 = vlaneseq
        %v769 = vshrl.u32 %v768, 7
        %v770 = vsub.s32 %v767, %v769
        %v771 = vrot.slane %v757, %v770
        %v772 = vcombine.high %v764, %v764
        %v773 = vcombine.high %v771, %v771
        %v774 = vcombine.high %v626, %v626
        %v776 = vunpack.c.l.s4 1983009808
        %v777 = vunpack.c.0.s8 %v776
        %v778 = vlaneseq
        %v779 = vshrl.u32 %v778, 7
        %v780 = vsub.s32 %v777, %v779
        %v781 = vrot.slane %v626, %v780
        %v783 = vunpack.c.l.s4 1983009808
        %v784 = vunpack.c.0.s8 %v783
        %v785 = vlaneseq
        %v786 = vshrl.u32 %v785, 7
        %v787 = vsub.s32 %v784, %v786
        %v788 = vrot.slane %v774, %v787
        %v789 = vcombine.high %v781, %v781
        %v790 = vcombine.high %v788, %v788
        %v791 = vcombine.high %v631, %v631
        %v793 = vunpack.c.l.s4 1983009808
        %v794 = vunpack.c.0.s8 %v793
        %v795 = vlaneseq
        %v796 = vshrl.u32 %v795, 7
        %v797 = vsub.s32 %v794, %v796
        %v798 = vrot.slane %v631, %v797
        %v800 = vunpack.c.l.s4 1983009808
        %v801 = vunpack.c.0.s8 %v800
        %v802 = vlaneseq
        %v803 = vshrl.u32 %v802, 7
        %v804 = vsub.s32 %v801, %v803
        %v805 = vrot.slane %v791, %v804
        %v806 = vcombine.high %v798, %v798
        %v807 = vcombine.high %v805, %v805
        %v808 = vcombine.high %v636, %v636
        %v810 = vunpack.c.l.s4 1983009808
        %v811 = vunpack.c.0.s8 %v810
        %v812 = vlaneseq
        %v813 = vshrl.u32 %v812, 7
        %v814 = vsub.s32 %v811, %v813
        %v815 = vrot.slane %v636, %v814
        %v817 = vunpack.c.l.s4 1983009808
        %v818 = vunpack.c.0.s8 %v817
        %v819 = vlaneseq
        %v820 = vshrl.u32 %v819, 7
        %v821 = vsub.s32 %v818, %v820
        %v822 = vrot.slane %v808, %v821
        %v823 = vcombine.high %v815, %v815
        %v824 = vcombine.high %v822, %v822
        %v825 = vcombine.high %v641, %v641
        %v827 = vunpack.c.l.s4 1983009808
        %v828 = vunpack.c.0.s8 %v827
        %v829 = vlaneseq
        %v830 = vshrl.u32 %v829, 7
        %v831 = vsub.s32 %v828, %v830
        %v832 = vrot.slane %v641, %v831
        %v834 = vunpack.c.l.s4 1983009808
        %v835 = vunpack.c.0.s8 %v834
        %v836 = vlaneseq
        %v837 = vshrl.u32 %v836, 7
        %v838 = vsub.s32 %v835, %v837
        %v839 = vrot.slane %v825, %v838
        %v840 = vcombine.high %v832, %v832
        %v841 = vcombine.high %v839, %v839
        %v842 = vcombine.high %v646, %v646
        %v844 = vunpack.c.l.s4 1983009808
        %v845 = vunpack.c.0.s8 %v844
        %v846 = vlaneseq
        %v847 = vshrl.u32 %v846, 7
        %v848 = vsub.s32 %v845, %v847
        %v849 = vrot.slane %v646, %v848
        %v851 = vunpack.c.l.s4 1983009808
        %v852 = vunpack.c.0.s8 %v851
        %v853 = vlaneseq
        %v854 = vshrl.u32 %v853, 7
        %v855 = vsub.s32 %v852, %v854
        %v856 = vrot.slane %v842, %v855
        %v857 = vcombine.high %v849, %v849
        %v858 = vcombine.high %v856, %v856
        %v859 = vcombine.high %v651, %v651
        %v861 = vunpack.c.l.s4 1983009808
        %v862 = vunpack.c.0.s8 %v861
        %v863 = vlaneseq
        %v864 = vshrl.u32 %v863, 7
        %v865 = vsub.s32 %v862, %v864
        %v866 = vrot.slane %v651, %v865
        %v868 = vunpack.c.l.s4 1983009808
        %v869 = vunpack.c.0.s8 %v868
        %v870 = vlaneseq
        %v871 = vshrl.u32 %v870, 7
        %v872 = vsub.s32 %v869, %v871
        %v873 = vrot.slane %v859, %v872
        %v874 = vcombine.high %v866, %v866
        %v875 = vcombine.high %v873, %v873
        %v876 = vcombine.high %v656, %v656
        %v878 = vunpack.c.l.s4 1983009808
        %v879 = vunpack.c.0.s8 %v878
        %v880 = vlaneseq
        %v881 = vshrl.u32 %v880, 7
        %v882 = vsub.s32 %v879, %v881
        %v883 = vrot.slane %v656, %v882
        %v885 = vunpack.c.l.s4 1983009808
        %v886 = vunpack.c.0.s8 %v885
        %v887 = vlaneseq
        %v888 = vshrl.u32 %v887, 7
        %v889 = vsub.s32 %v886, %v888
        %v890 = vrot.slane %v876, %v889
        %v891 = vcombine.high %v883, %v883
        %v892 = vcombine.high %v890, %v890
        %v893 = vcombine.high %v661, %v661
        %v895 = vunpack.c.l.s4 1983009808
        %v896 = vunpack.c.0.s8 %v895
        %v897 = vlaneseq
        %v898 = vshrl.u32 %v897, 7
        %v899 = vsub.s32 %v896, %v898
        %v900 = vrot.slane %v661, %v899
        %v902 = vunpack.c.l.s4 1983009808
        %v903 = vunpack.c.0.s8 %v902
        %v904 = vlaneseq
        %v905 = vshrl.u32 %v904, 7
        %v906 = vsub.s32 %v903, %v905
        %v907 = vrot.slane %v893, %v906
        %v908 = vcombine.high %v900, %v900
        %v909 = vcombine.high %v907, %v907
        %v910 = vcombine.high %v666, %v666
        %v912 = vunpack.c.l.s4 1983009808
        %v913 = vunpack.c.0.s8 %v912
        %v914 = vlaneseq
        %v915 = vshrl.u32 %v914, 7
        %v916 = vsub.s32 %v913, %v915
        %v917 = vrot.slane %v666, %v916
        %v919 = vunpack.c.l.s4 1983009808
        %v920 = vunpack.c.0.s8 %v919
        %v921 = vlaneseq
        %v922 = vshrl.u32 %v921, 7
        %v923 = vsub.s32 %v920, %v922
        %v924 = vrot.slane %v910, %v923
        %v925 = vcombine.high %v917, %v917
        %v926 = vcombine.high %v924, %v924
        %v927 = vcombine.high %v671, %v671
        %v929 = vunpack.c.l.s4 1983009808
        %v930 = vunpack.c.0.s8 %v929
        %v931 = vlaneseq
        %v932 = vshrl.u32 %v931, 7
        %v933 = vsub.s32 %v930, %v932
        %v934 = vrot.slane %v671, %v933
        %v936 = vunpack.c.l.s4 1983009808
        %v937 = vunpack.c.0.s8 %v936
        %v938 = vlaneseq
        %v939 = vshrl.u32 %v938, 7
        %v940 = vsub.s32 %v937, %v939
        %v941 = vrot.slane %v927, %v940
        %v942 = vcombine.high %v934, %v934
        %v943 = vcombine.high %v941, %v941
        %v944 = vcombine.high %v676, %v676
        %v946 = vunpack.c.l.s4 1983009808
        %v947 = vunpack.c.0.s8 %v946
        %v948 = vlaneseq
        %v949 = vshrl.u32 %v948, 7
        %v950 = vsub.s32 %v947, %v949
        %v951 = vrot.slane %v676, %v950
        %v953 = vunpack.c.l.s4 1983009808
        %v954 = vunpack.c.0.s8 %v953
        %v955 = vlaneseq
        %v956 = vshrl.u32 %v955, 7
        %v957 = vsub.s32 %v954, %v956
        %v958 = vrot.slane %v944, %v957
        %v959 = vcombine.high %v951, %v951
        %v960 = vcombine.high %v958, %v958
        %v961 = vcombine.high %v681, %v681
        %v963 = vunpack.c.l.s4 1983009808
        %v964 = vunpack.c.0.s8 %v963
        %v965 = vlaneseq
        %v966 = vshrl.u32 %v965, 7
        %v967 = vsub.s32 %v964, %v966
        %v968 = vrot.slane %v681, %v967
        %v970 = vunpack.c.l.s4 1983009808
        %v971 = vunpack.c.0.s8 %v970
        %v972 = vlaneseq
        %v973 = vshrl.u32 %v972, 7
        %v974 = vsub.s32 %v971, %v973
        %v975 = vrot.slane %v961, %v974
        %v976 = vcombine.high %v968, %v968
        %v977 = vcombine.high %v975, %v975
        %v978 = vcombine.high %v686, %v686
        %v980 = vunpack.c.l.s4 1983009808
        %v981 = vunpack.c.0.s8 %v980
        %v982 = vlaneseq
        %v983 = vshrl.u32 %v982, 7
        %v984 = vsub.s32 %v981, %v983
        %v985 = vrot.slane %v686, %v984
        %v987 = vunpack.c.l.s4 1983009808
        %v988 = vunpack.c.0.s8 %v987
        %v989 = vlaneseq
        %v990 = vshrl.u32 %v989, 7
        %v991 = vsub.s32 %v988, %v990
        %v992 = vrot.slane %v978, %v991
        %v993 = vcombine.high %v985, %v985
        %v994 = vcombine.high %v992, %v992
        %v995 = vcombine.low %v713, %v721
        %v996 = vcombine.low %v720, %v722
        %v998 = vunpack.c.l.s4 1983009808
        %v999 = vunpack.c.0.s8 %v998
        %v1000 = vlaneseq
        %v1001 = vshrl.u32 %v1000, 7
        %v1002 = vsub.s32 %v999, %v1001
        %v1003 = vrot.slane %v995, %v1002
        %v1005 = vunpack.c.l.s4 1983009808
        %v1006 = vunpack.c.0.s8 %v1005
        %v1007 = vlaneseq
        %v1008 = vshrl.u32 %v1007, 7
        %v1009 = vsub.s32 %v1006, %v1008
        %v1010 = vrot.slane %v996, %v1009
        %v1011 = vcombine.low %v1003, %v1010
        %v1012 = vcombine.low %v730, %v738
        %v1013 = vcombine.low %v737, %v739
        %v1015 = vunpack.c.l.s4 1983009808
        %v1016 = vunpack.c.0.s8 %v1015
        %v1017 = vlaneseq
        %v1018 = vshrl.u32 %v1017, 7
        %v1019 = vsub.s32 %v1016, %v1018
        %v1020 = vrot.slane %v1012, %v1019
        %v1022 = vunpack.c.l.s4 1983009808
        %v1023 = vunpack.c.0.s8 %v1022
        %v1024 = vlaneseq
        %v1025 = vshrl.u32 %v1024, 7
        %v1026 = vsub.s32 %v1023, %v1025
        %v1027 = vrot.slane %v1013, %v1026
        %v1028 = vcombine.low %v1020, %v1027
        %v1029 = vcombine.low %v747, %v755
        %v1030 = vcombine.low %v754, %v756
        %v1032 = vunpack.c.l.s4 1983009808
        %v1033 = vunpack.c.0.s8 %v1032
        %v1034 = vlaneseq
        %v1035 = vshrl.u32 %v1034, 7
        %v1036 = vsub.s32 %v1033, %v1035
        %v1037 = vrot.slane %v1029, %v1036
        %v1039 = vunpack.c.l.s4 1983009808
        %v1040 = vunpack.c.0.s8 %v1039
        %v1041 = vlaneseq
        %v1042 = vshrl.u32 %v1041, 7
        %v1043 = vsub.s32 %v1040, %v1042
        %v1044 = vrot.slane %v1030, %v1043
        %v1045 = vcombine.low %v1037, %v1044
        %v1046 = vcombine.low %v764, %v772
        %v1047 = vcombine.low %v771, %v773
        %v1049 = vunpack.c.l.s4 1983009808
        %v1050 = vunpack.c.0.s8 %v1049
        %v1051 = vlaneseq
        %v1052 = vshrl.u32 %v1051, 7
        %v1053 = vsub.s32 %v1050, %v1052
        %v1054 = vrot.slane %v1046, %v1053
        %v1056 = vunpack.c.l.s4 1983009808
        %v1057 = vunpack.c.0.s8 %v1056
        %v1058 = vlaneseq
        %v1059 = vshrl.u32 %v1058, 7
        %v1060 = vsub.s32 %v1057, %v1059
        %v1061 = vrot.slane %v1047, %v1060
        %v1062 = vcombine.low %v1054, %v1061
        %v1064 = vunpack.c.l.s4 1983009808
        %v1065 = vunpack.c.0.s8 %v1064
        %v1066 = vlaneseq
        %v1067 = vshrl.u32 %v1066, 7
        %v1068 = vsub.s32 %v1065, %v1067
        %v1069 = vrot.slane %v781, %v1068
        %v1070 = vcombine.low %v789, %v788
        %v1071 = vcombine.low %v790, %v798
        %v1073 = vunpack.c.l.s4 1983009808
        %v1074 = vunpack.c.0.s8 %v1073
        %v1075 = vlaneseq
        %v1076 = vshrl.u32 %v1075, 7
        %v1077 = vsub.s32 %v1074, %v1076
        %v1078 = vrot.slane %v1070, %v1077
        %v1080 = vunpack.c.l.s4 1983009808
        %v1081 = vunpack.c.0.s8 %v1080
        %v1082 = vlaneseq
        %v1083 = vshrl.u32 %v1082, 7
        %v1084 = vsub.s32 %v1081, %v1083
        %v1085 = vrot.slane %v1071, %v1084
        %v1086 = vcombine.low %v1078, %v1085
        %v1087 = vcombine.low %v806, %v805
        %v1088 = vcombine.low %v807, %v815
        %v1090 = vunpack.c.l.s4 1983009808
        %v1091 = vunpack.c.0.s8 %v1090
        %v1092 = vlaneseq
        %v1093 = vshrl.u32 %v1092, 7
        %v1094 = vsub.s32 %v1091, %v1093
        %v1095 = vrot.slane %v1087, %v1094
        %v1097 = vunpack.c.l.s4 1983009808
        %v1098 = vunpack.c.0.s8 %v1097
        %v1099 = vlaneseq
        %v1100 = vshrl.u32 %v1099, 7
        %v1101 = vsub.s32 %v1098, %v1100
        %v1102 = vrot.slane %v1088, %v1101
        %v1103 = vcombine.low %v1095, %v1102
        %v1104 = vcombine.low %v823, %v822
        %v1105 = vcombine.low %v824, %v832
        %v1107 = vunpack.c.l.s4 1983009808
        %v1108 = vunpack.c.0.s8 %v1107
        %v1109 = vlaneseq
        %v1110 = vshrl.u32 %v1109, 7
        %v1111 = vsub.s32 %v1108, %v1110
        %v1112 = vrot.slane %v1104, %v1111
        %v1114 = vunpack.c.l.s4 1983009808
        %v1115 = vunpack.c.0.s8 %v1114
        %v1116 = vlaneseq
        %v1117 = vshrl.u32 %v1116, 7
        %v1118 = vsub.s32 %v1115, %v1117
        %v1119 = vrot.slane %v1105, %v1118
        %v1120 = vcombine.low %v1112, %v1119
        %v1121 = vcombine.low %v840, %v839
        %v1122 = vcombine.low %v841, %v849
        %v1124 = vunpack.c.l.s4 1983009808
        %v1125 = vunpack.c.0.s8 %v1124
        %v1126 = vlaneseq
        %v1127 = vshrl.u32 %v1126, 7
        %v1128 = vsub.s32 %v1125, %v1127
        %v1129 = vrot.slane %v1121, %v1128
        %v1131 = vunpack.c.l.s4 1983009808
        %v1132 = vunpack.c.0.s8 %v1131
        %v1133 = vlaneseq
        %v1134 = vshrl.u32 %v1133, 7
        %v1135 = vsub.s32 %v1132, %v1134
        %v1136 = vrot.slane %v1122, %v1135
        %v1137 = vcombine.low %v1129, %v1136
        %v1139 = vunpack.c.l.s4 1983009808
        %v1140 = vunpack.c.0.s8 %v1139
        %v1141 = vlaneseq
        %v1142 = vshrl.u32 %v1141, 7
        %v1143 = vsub.s32 %v1140, %v1142
        %v1144 = vrot.slane %v857, %v1143
        %v1145 = vcombine.low %v856, %v858
        %v1146 = vcombine.low %v866, %v874
        %v1148 = vunpack.c.l.s4 1983009808
        %v1149 = vunpack.c.0.s8 %v1148
        %v1150 = vlaneseq
        %v1151 = vshrl.u32 %v1150, 7
        %v1152 = vsub.s32 %v1149, %v1151
        %v1153 = vrot.slane %v1145, %v1152
        %v1155 = vunpack.c.l.s4 1983009808
        %v1156 = vunpack.c.0.s8 %v1155
        %v1157 = vlaneseq
        %v1158 = vshrl.u32 %v1157, 7
        %v1159 = vsub.s32 %v1156, %v1158
        %v1160 = vrot.slane %v1146, %v1159
        %v1161 = vcombine.low %v1153, %v1160
        %v1162 = vcombine.low %v873, %v875
        %v1163 = vcombine.low %v883, %v891
        %v1165 = vunpack.c.l.s4 1983009808
        %v1166 = vunpack.c.0.s8 %v1165
        %v1167 = vlaneseq
        %v1168 = vshrl.u32 %v1167, 7
        %v1169 = vsub.s32 %v1166, %v1168
        %v1170 = vrot.slane %v1162, %v1169
        %v1172 = vunpack.c.l.s4 1983009808
        %v1173 = vunpack.c.0.s8 %v1172
        %v1174 = vlaneseq
        %v1175 = vshrl.u32 %v1174, 7
        %v1176 = vsub.s32 %v1173, %v1175
        %v1177 = vrot.slane %v1163, %v1176
        %v1178 = vcombine.low %v1170, %v1177
        %v1179 = vcombine.low %v890, %v892
        %v1180 = vcombine.low %v900, %v908
        %v1182 = vunpack.c.l.s4 1983009808
        %v1183 = vunpack.c.0.s8 %v1182
        %v1184 = vlaneseq
        %v1185 = vshrl.u32 %v1184, 7
        %v1186 = vsub.s32 %v1183, %v1185
        %v1187 = vrot.slane %v1179, %v1186
        %v1189 = vunpack.c.l.s4 1983009808
        %v1190 = vunpack.c.0.s8 %v1189
        %v1191 = vlaneseq
        %v1192 = vshrl.u32 %v1191, 7
        %v1193 = vsub.s32 %v1190, %v1192
        %v1194 = vrot.slane %v1180, %v1193
        %v1195 = vcombine.low %v1187, %v1194
        %v1196 = vcombine.low %v907, %v909
        %v1197 = vcombine.low %v917, %v925
        %v1199 = vunpack.c.l.s4 1983009808
        %v1200 = vunpack.c.0.s8 %v1199
        %v1201 = vlaneseq
        %v1202 = vshrl.u32 %v1201, 7
        %v1203 = vsub.s32 %v1200, %v1202
        %v1204 = vrot.slane %v1196, %v1203
        %v1206 = vunpack.c.l.s4 1983009808
        %v1207 = vunpack.c.0.s8 %v1206
        %v1208 = vlaneseq
        %v1209 = vshrl.u32 %v1208, 7
        %v1210 = vsub.s32 %v1207, %v1209
        %v1211 = vrot.slane %v1197, %v1210
        %v1212 = vcombine.low %v1204, %v1211
        %v1214 = vunpack.c.l.s4 1983009808
        %v1215 = vunpack.c.0.s8 %v1214
        %v1216 = vlaneseq
        %v1217 = vshrl.u32 %v1216, 7
        %v1218 = vsub.s32 %v1215, %v1217
        %v1219 = vrot.slane %v924, %v1218
        %v1220 = vcombine.low %v926, %v934
        %v1221 = vcombine.low %v942, %v941
        %v1223 = vunpack.c.l.s4 1983009808
        %v1224 = vunpack.c.0.s8 %v1223
        %v1225 = vlaneseq
        %v1226 = vshrl.u32 %v1225, 7
        %v1227 = vsub.s32 %v1224, %v1226
        %v1228 = vrot.slane %v1220, %v1227
        %v1230 = vunpack.c.l.s4 1983009808
        %v1231 = vunpack.c.0.s8 %v1230
        %v1232 = vlaneseq
        %v1233 = vshrl.u32 %v1232, 7
        %v1234 = vsub.s32 %v1231, %v1233
        %v1235 = vrot.slane %v1221, %v1234
        %v1236 = vcombine.low %v1228, %v1235
        %v1237 = vcombine.low %v943, %v951
        %v1238 = vcombine.low %v959, %v958
        %v1240 = vunpack.c.l.s4 1983009808
        %v1241 = vunpack.c.0.s8 %v1240
        %v1242 = vlaneseq
        %v1243 = vshrl.u32 %v1242, 7
        %v1244 = vsub.s32 %v1241, %v1243
        %v1245 = vrot.slane %v1237, %v1244
        %v1247 = vunpack.c.l.s4 1983009808
        %v1248 = vunpack.c.0.s8 %v1247
        %v1249 = vlaneseq
        %v1250 = vshrl.u32 %v1249, 7
        %v1251 = vsub.s32 %v1248, %v1250
        %v1252 = vrot.slane %v1238, %v1251
        %v1253 = vcombine.low %v1245, %v1252
        %v1254 = vcombine.low %v960, %v968
        %v1255 = vcombine.low %v976, %v975
        %v1257 = vunpack.c.l.s4 1983009808
        %v1258 = vunpack.c.0.s8 %v1257
        %v1259 = vlaneseq
        %v1260 = vshrl.u32 %v1259, 7
        %v1261 = vsub.s32 %v1258, %v1260
        %v1262 = vrot.slane %v1254, %v1261
        %v1264 = vunpack.c.l.s4 1983009808
        %v1265 = vunpack.c.0.s8 %v1264
        %v1266 = vlaneseq
        %v1267 = vshrl.u32 %v1266, 7
        %v1268 = vsub.s32 %v1265, %v1267
        %v1269 = vrot.slane %v1255, %v1268
        %v1270 = vcombine.low %v1262, %v1269
        %v1271 = vcombine.low %v977, %v985
        %v1272 = vcombine.low %v993, %v992
        %v1274 = vunpack.c.l.s4 1983009808
        %v1275 = vunpack.c.0.s8 %v1274
        %v1276 = vlaneseq
        %v1277 = vshrl.u32 %v1276, 7
        %v1278 = vsub.s32 %v1275, %v1277
        %v1279 = vrot.slane %v1271, %v1278
        %v1281 = vunpack.c.l.s4 1983009808
        %v1282 = vunpack.c.0.s8 %v1281
        %v1283 = vlaneseq
        %v1284 = vshrl.u32 %v1283, 7
        %v1285 = vsub.s32 %v1282, %v1284
        %v1286 = vrot.slane %v1272, %v1285
        %v1287 = vcombine.low %v1279, %v1286
        %v1289 = vunpack.c.l.s4 1983009808
        %v1290 = vunpack.c.0.s8 %v1289
        %v1291 = vlaneseq
        %v1292 = vshrl.u32 %v1291, 7
        %v1293 = vsub.s32 %v1290, %v1292
        %v1294 = vrot.slane %v994, %v1293
        %v1315 = vpack.c.bf16 %v1028, %v1011
        %v1316 = vpack.c.bf16 %v1062, %v1045
        %v1317 = vpack.c.bf16 %v1069, %v1069
        %v1318 = vpack.c.bf16 %v1103, %v1086
        %v1319 = vpack.c.bf16 %v1137, %v1120
        %v1320 = vpack.c.bf16 %v1144, %v1144
        %v1321 = vpack.c.bf16 %v1178, %v1161
        %v1322 = vpack.c.bf16 %v1212, %v1195
        %v1323 = vpack.c.bf16 %v1219, %v1219
        %v1324 = vpack.c.bf16 %v1253, %v1236
        %v1325 = vpack.c.bf16 %v1287, %v1270
        %v1326 = vpack.c.bf16 %v1294, %v1294
        %1335 = vrot.lane.b32.xlu0 %v1315, 127
        %v1336 = vpop.permute.xlu0 %1335
        %1337 = vrot.lane.b32.xlu0 %v1316, 127
        %v1338 = vpop.permute.xlu0 %1337
        %1339 = vrot.lane.b32.xlu0 %v1318, 127
        %v1340 = vpop.permute.xlu0 %1339
        %1341 = vrot.lane.b32.xlu0 %v1319, 127
        %v1342 = vpop.permute.xlu0 %1341
        %1343 = vrot.lane.b32.xlu0 %v1321, 127
        %v1344 = vpop.permute.xlu0 %1343
        %1345 = vrot.lane.b32.xlu0 %v1322, 127
        %v1346 = vpop.permute.xlu0 %1345
        %1347 = vrot.lane.b32.xlu0 %v1324, 127
        %v1348 = vpop.permute.xlu0 %1347
        %1349 = vrot.lane.b32.xlu0 %v1325, 127
        %v1350 = vpop.permute.xlu0 %1349
        %1351 = vrot.lane.b32.xlu0 %v1315, 126
        %v1352 = vpop.permute.xlu0 %1351
        %1353 = vrot.lane.b32.xlu0 %v1316, 126
        %v1354 = vpop.permute.xlu0 %1353
        %1355 = vrot.lane.b32.xlu0 %v1318, 126
        %v1356 = vpop.permute.xlu0 %1355
        %1357 = vrot.lane.b32.xlu0 %v1319, 126
        %v1358 = vpop.permute.xlu0 %1357
        %1359 = vrot.lane.b32.xlu0 %v1321, 126
        %v1360 = vpop.permute.xlu0 %1359
        %1361 = vrot.lane.b32.xlu0 %v1322, 126
        %v1362 = vpop.permute.xlu0 %1361
        %1363 = vrot.lane.b32.xlu0 %v1324, 126
        %v1364 = vpop.permute.xlu0 %1363
        %1365 = vrot.lane.b32.xlu0 %v1325, 126
        %v1366 = vpop.permute.xlu0 %1365
        %vm1367 = vsmask.f32 7424
        %v1369 = vshrl.u32 %v1315, 16
        %v1371 = vshll.u32 %v1315, 16
        %v1373 = vrot.slane %v1371, 1
        %v1374 = vor.u32 %v1369, %v1373
        %v1376 = vshll.u32 %v1316, 16
        %v1378 = vrot.slane %v1376, 1
        %v1379 = vsel %vm1367, %v1374, %v1378
        %v1380 = vshrl.u32 %v1316, 16
        %v1382 = vor.u32 %v1380, %v1378
        %v1384 = vshll.u32 %v1317, 16
        %v1386 = vrot.slane %v1384, 1
        %v1387 = vsel %vm1367, %v1382, %v1386
        %v1389 = vshrl.u32 %v1318, 16
        %v1391 = vshll.u32 %v1318, 16
        %v1393 = vrot.slane %v1391, 1
        %v1394 = vor.u32 %v1389, %v1393
        %v1396 = vshll.u32 %v1319, 16
        %v1398 = vrot.slane %v1396, 1
        %v1399 = vsel %vm1367, %v1394, %v1398
        %v1400 = vshrl.u32 %v1319, 16
        %v1402 = vor.u32 %v1400, %v1398
        %v1404 = vshll.u32 %v1320, 16
        %v1406 = vrot.slane %v1404, 1
        %v1407 = vsel %vm1367, %v1402, %v1406
        %v1409 = vshrl.u32 %v1321, 16
        %v1411 = vshll.u32 %v1321, 16
        %v1413 = vrot.slane %v1411, 1
        %v1414 = vor.u32 %v1409, %v1413
        %v1416 = vshll.u32 %v1322, 16
        %v1418 = vrot.slane %v1416, 1
        %v1419 = vsel %vm1367, %v1414, %v1418
        %v1420 = vshrl.u32 %v1322, 16
        %v1422 = vor.u32 %v1420, %v1418
        %v1424 = vshll.u32 %v1323, 16
        %v1426 = vrot.slane %v1424, 1
        %v1427 = vsel %vm1367, %v1422, %v1426
        %v1429 = vshrl.u32 %v1324, 16
        %v1431 = vshll.u32 %v1324, 16
        %v1433 = vrot.slane %v1431, 1
        %v1434 = vor.u32 %v1429, %v1433
        %v1436 = vshll.u32 %v1325, 16
        %v1438 = vrot.slane %v1436, 1
        %v1439 = vsel %vm1367, %v1434, %v1438
        %v1440 = vshrl.u32 %v1325, 16
        %v1442 = vor.u32 %v1440, %v1438
        %v1444 = vshll.u32 %v1326, 16
        %v1446 = vrot.slane %v1444, 1
        %v1447 = vsel %vm1367, %v1442, %v1446
        %1448 = vrot.lane.b32.xlu0 %v1379, 127
        %v1449 = vpop.permute.xlu0 %1448
        %1450 = vrot.lane.b32.xlu0 %v1387, 127
        %v1451 = vpop.permute.xlu0 %1450
        %1452 = vrot.lane.b32.xlu0 %v1399, 127
        %v1453 = vpop.permute.xlu0 %1452
        %1454 = vrot.lane.b32.xlu0 %v1407, 127
        %v1455 = vpop.permute.xlu0 %1454
        %1456 = vrot.lane.b32.xlu0 %v1419, 127
        %v1457 = vpop.permute.xlu0 %1456
        %1458 = vrot.lane.b32.xlu0 %v1427, 127
        %v1459 = vpop.permute.xlu0 %1458
        %1460 = vrot.lane.b32.xlu0 %v1439, 127
        %v1461 = vpop.permute.xlu0 %1460
        %1462 = vrot.lane.b32.xlu0 %v1447, 127
        %v1463 = vpop.permute.xlu0 %1462
        %1464 = vrot.lane.b32.xlu0 %v1379, 126
        %v1465 = vpop.permute.xlu0 %1464
        %1466 = vrot.lane.b32.xlu0 %v1387, 126
        %v1467 = vpop.permute.xlu0 %1466
        %1468 = vrot.lane.b32.xlu0 %v1399, 126
        %v1469 = vpop.permute.xlu0 %1468
        %1470 = vrot.lane.b32.xlu0 %v1407, 126
        %v1471 = vpop.permute.xlu0 %1470
        %1472 = vrot.lane.b32.xlu0 %v1419, 126
        %v1473 = vpop.permute.xlu0 %1472
        %1474 = vrot.lane.b32.xlu0 %v1427, 126
        %v1475 = vpop.permute.xlu0 %1474
        %1476 = vrot.lane.b32.xlu0 %v1439, 126
        %v1477 = vpop.permute.xlu0 %1476
        %1478 = vrot.lane.b32.xlu0 %v1447, 126
        %v1479 = vpop.permute.xlu0 %1478
        %vm1484 = vcmask 1046528
        %v1485 = vrot.slane %v1315, 1
        %v1486 = vrot.slane %v1316, 1
        %v1487 = vsel %vm1484, %v1485, %v1486
        %v1488 = vrot.slane %v1317, 1
        %v1489 = vsel %vm1484, %v1486, %v1488
        %v1490 = vrot.slane %v1318, 1
        %v1491 = vrot.slane %v1319, 1
        %v1492 = vsel %vm1484, %v1490, %v1491
        %v1493 = vrot.slane %v1320, 1
        %v1494 = vsel %vm1484, %v1491, %v1493
        %v1495 = vrot.slane %v1321, 1
        %v1496 = vrot.slane %v1322, 1
        %v1497 = vsel %vm1484, %v1495, %v1496
        %v1498 = vrot.slane %v1323, 1
        %v1499 = vsel %vm1484, %v1496, %v1498
        %v1500 = vrot.slane %v1324, 1
        %v1501 = vrot.slane %v1325, 1
        %v1502 = vsel %vm1484, %v1500, %v1501
        %v1503 = vrot.slane %v1326, 1
        %v1504 = vsel %vm1484, %v1501, %v1503
        %1505 = vrot.lane.b32.xlu0 %v1487, 127
        %v1506 = vpop.permute.xlu0 %1505
        %1507 = vrot.lane.b32.xlu0 %v1489, 127
        %v1508 = vpop.permute.xlu0 %1507
        %1509 = vrot.lane.b32.xlu0 %v1492, 127
        %v1510 = vpop.permute.xlu0 %1509
        %1511 = vrot.lane.b32.xlu0 %v1494, 127
        %v1512 = vpop.permute.xlu0 %1511
        %1513 = vrot.lane.b32.xlu0 %v1497, 127
        %v1514 = vpop.permute.xlu0 %1513
        %1515 = vrot.lane.b32.xlu0 %v1499, 127
        %v1516 = vpop.permute.xlu0 %1515
        %1517 = vrot.lane.b32.xlu0 %v1502, 127
        %v1518 = vpop.permute.xlu0 %1517
        %1519 = vrot.lane.b32.xlu0 %v1504, 127
        %v1520 = vpop.permute.xlu0 %1519
        %1521 = vrot.lane.b32.xlu0 %v1487, 126
        %v1522 = vpop.permute.xlu0 %1521
        %1523 = vrot.lane.b32.xlu0 %v1489, 126
        %v1524 = vpop.permute.xlu0 %1523
        %1525 = vrot.lane.b32.xlu0 %v1492, 126
        %v1526 = vpop.permute.xlu0 %1525
        %1527 = vrot.lane.b32.xlu0 %v1494, 126
        %v1528 = vpop.permute.xlu0 %1527
        %1529 = vrot.lane.b32.xlu0 %v1497, 126
        %v1530 = vpop.permute.xlu0 %1529
        %1531 = vrot.lane.b32.xlu0 %v1499, 126
        %v1532 = vpop.permute.xlu0 %1531
        %1533 = vrot.lane.b32.xlu0 %v1502, 126
        %v1534 = vpop.permute.xlu0 %1533
        %1535 = vrot.lane.b32.xlu0 %v1504, 126
        %v1536 = vpop.permute.xlu0 %1535
        %v1537 = vpack.i.b16 %v1318, %v1315
        %v1539 = vpack.i.b16 %v1389, %v1369
        %v1541 = vpack.i.b16 %v1324, %v1321
        %v1543 = vpack.i.b16 %v1429, %v1409
        %v1547 = vpack.i.b16 %v1340, %v1336
        %v1549 = vshrl.u32 %v1336, 16
        %v1550 = vshrl.u32 %v1340, 16
        %v1551 = vpack.i.b16 %v1550, %v1549
        %v1555 = vpack.i.b16 %v1348, %v1344
        %v1557 = vshrl.u32 %v1344, 16
        %v1558 = vshrl.u32 %v1348, 16
        %v1559 = vpack.i.b16 %v1558, %v1557
        %v1563 = vpack.i.b16 %v1356, %v1352
        %v1565 = vshrl.u32 %v1352, 16
        %v1566 = vshrl.u32 %v1356, 16
        %v1567 = vpack.i.b16 %v1566, %v1565
        %v1571 = vpack.i.b16 %v1364, %v1360
        %v1573 = vshrl.u32 %v1360, 16
        %v1574 = vshrl.u32 %v1364, 16
        %v1575 = vpack.i.b16 %v1574, %v1573
        %v1579 = vpack.i.b16 %v1399, %v1379
        %v1581 = vshrl.u32 %v1379, 16
        %v1582 = vshrl.u32 %v1399, 16
        %v1583 = vpack.i.b16 %v1582, %v1581
        %v1587 = vpack.i.b16 %v1439, %v1419
        %v1589 = vshrl.u32 %v1419, 16
        %v1590 = vshrl.u32 %v1439, 16
        %v1591 = vpack.i.b16 %v1590, %v1589
        %v1595 = vpack.i.b16 %v1453, %v1449
        %v1597 = vshrl.u32 %v1449, 16
        %v1598 = vshrl.u32 %v1453, 16
        %v1599 = vpack.i.b16 %v1598, %v1597
        %v1603 = vpack.i.b16 %v1461, %v1457
        %v1605 = vshrl.u32 %v1457, 16
        %v1606 = vshrl.u32 %v1461, 16
        %v1607 = vpack.i.b16 %v1606, %v1605
        %v1611 = vpack.i.b16 %v1469, %v1465
        %v1613 = vshrl.u32 %v1465, 16
        %v1614 = vshrl.u32 %v1469, 16
        %v1615 = vpack.i.b16 %v1614, %v1613
        %v1619 = vpack.i.b16 %v1477, %v1473
        %v1621 = vshrl.u32 %v1473, 16
        %v1622 = vshrl.u32 %v1477, 16
        %v1623 = vpack.i.b16 %v1622, %v1621
        %v1627 = vpack.i.b16 %v1492, %v1487
        %v1629 = vshrl.u32 %v1487, 16
        %v1630 = vshrl.u32 %v1492, 16
        %v1631 = vpack.i.b16 %v1630, %v1629
        %v1635 = vpack.i.b16 %v1502, %v1497
        %v1637 = vshrl.u32 %v1497, 16
        %v1638 = vshrl.u32 %v1502, 16
        %v1639 = vpack.i.b16 %v1638, %v1637
        %v1643 = vpack.i.b16 %v1510, %v1506
        %v1645 = vshrl.u32 %v1506, 16
        %v1646 = vshrl.u32 %v1510, 16
        %v1647 = vpack.i.b16 %v1646, %v1645
        %v1651 = vpack.i.b16 %v1518, %v1514
        %v1653 = vshrl.u32 %v1514, 16
        %v1654 = vshrl.u32 %v1518, 16
        %v1655 = vpack.i.b16 %v1654, %v1653
        %v1659 = vpack.i.b16 %v1526, %v1522
        %v1661 = vshrl.u32 %v1522, 16
        %v1662 = vshrl.u32 %v1526, 16
        %v1663 = vpack.i.b16 %v1662, %v1661
        %v1667 = vpack.i.b16 %v1534, %v1530
        %v1669 = vshrl.u32 %v1530, 16
        %v1670 = vshrl.u32 %v1534, 16
        %v1671 = vpack.i.b16 %v1670, %v1669
        %v1674 = vpack.i.b16 0, 0
        %v1676 = vshrl.u32 0, 16
        %v1677 = vpack.i.b16 %v1676, %v1676
        %v1679 = vpack.i.b16 %v1319, %v1316
        %v1681 = vpack.i.b16 %v1400, %v1380
        %v1683 = vpack.i.b16 %v1325, %v1322
        %v1685 = vpack.i.b16 %v1440, %v1420
        %v1689 = vpack.i.b16 %v1342, %v1338
        %v1691 = vshrl.u32 %v1338, 16
        %v1692 = vshrl.u32 %v1342, 16
        %v1693 = vpack.i.b16 %v1692, %v1691
        %v1697 = vpack.i.b16 %v1350, %v1346
        %v1699 = vshrl.u32 %v1346, 16
        %v1700 = vshrl.u32 %v1350, 16
        %v1701 = vpack.i.b16 %v1700, %v1699
        %v1705 = vpack.i.b16 %v1358, %v1354
        %v1707 = vshrl.u32 %v1354, 16
        %v1708 = vshrl.u32 %v1358, 16
        %v1709 = vpack.i.b16 %v1708, %v1707
        %v1713 = vpack.i.b16 %v1366, %v1362
        %v1715 = vshrl.u32 %v1362, 16
        %v1716 = vshrl.u32 %v1366, 16
        %v1717 = vpack.i.b16 %v1716, %v1715
        %v1721 = vpack.i.b16 %v1407, %v1387
        %v1723 = vshrl.u32 %v1387, 16
        %v1724 = vshrl.u32 %v1407, 16
        %v1725 = vpack.i.b16 %v1724, %v1723
        %v1729 = vpack.i.b16 %v1447, %v1427
        %v1731 = vshrl.u32 %v1427, 16
        %v1732 = vshrl.u32 %v1447, 16
        %v1733 = vpack.i.b16 %v1732, %v1731
        %v1737 = vpack.i.b16 %v1455, %v1451
        %v1739 = vshrl.u32 %v1451, 16
        %v1740 = vshrl.u32 %v1455, 16
        %v1741 = vpack.i.b16 %v1740, %v1739
        %v1745 = vpack.i.b16 %v1463, %v1459
        %v1747 = vshrl.u32 %v1459, 16
        %v1748 = vshrl.u32 %v1463, 16
        %v1749 = vpack.i.b16 %v1748, %v1747
        %v1753 = vpack.i.b16 %v1471, %v1467
        %v1755 = vshrl.u32 %v1467, 16
        %v1756 = vshrl.u32 %v1471, 16
        %v1757 = vpack.i.b16 %v1756, %v1755
        %v1761 = vpack.i.b16 %v1479, %v1475
        %v1763 = vshrl.u32 %v1475, 16
        %v1764 = vshrl.u32 %v1479, 16
        %v1765 = vpack.i.b16 %v1764, %v1763
        %v1769 = vpack.i.b16 %v1494, %v1489
        %v1771 = vshrl.u32 %v1489, 16
        %v1772 = vshrl.u32 %v1494, 16
        %v1773 = vpack.i.b16 %v1772, %v1771
        %v1777 = vpack.i.b16 %v1504, %v1499
        %v1779 = vshrl.u32 %v1499, 16
        %v1780 = vshrl.u32 %v1504, 16
        %v1781 = vpack.i.b16 %v1780, %v1779
        %v1785 = vpack.i.b16 %v1512, %v1508
        %v1787 = vshrl.u32 %v1508, 16
        %v1788 = vshrl.u32 %v1512, 16
        %v1789 = vpack.i.b16 %v1788, %v1787
        %v1793 = vpack.i.b16 %v1520, %v1516
        %v1795 = vshrl.u32 %v1516, 16
        %v1796 = vshrl.u32 %v1520, 16
        %v1797 = vpack.i.b16 %v1796, %v1795
        %v1801 = vpack.i.b16 %v1528, %v1524
        %v1803 = vshrl.u32 %v1524, 16
        %v1804 = vshrl.u32 %v1528, 16
        %v1805 = vpack.i.b16 %v1804, %v1803
        %v1809 = vpack.i.b16 %v1536, %v1532
        %v1811 = vshrl.u32 %v1532, 16
        %v1812 = vshrl.u32 %v1536, 16
        %v1813 = vpack.i.b16 %v1812, %v1811
        %v1815 = vcombine.low %v1537, %v1547
        %v1816 = vcombine.high %v1537, %v1547
        %v1818 = vunpack.c.l.s4 1983009808
        %v1819 = vunpack.c.0.s8 %v1818
        %v1820 = vlaneseq
        %v1821 = vshrl.u32 %v1820, 7
        %v1822 = vsub.s32 %v1819, %v1821
        %v1823 = vrot.slane %v1815, %v1822
        %v1825 = vunpack.c.l.s4 1983009808
        %v1826 = vunpack.c.0.s8 %v1825
        %v1827 = vlaneseq
        %v1828 = vshrl.u32 %v1827, 7
        %v1829 = vsub.s32 %v1826, %v1828
        %v1830 = vrot.slane %v1816, %v1829
        %v1831 = vcombine.low %v1541, %v1555
        %v1832 = vcombine.high %v1541, %v1555
        %v1834 = vunpack.c.l.s4 1983009808
        %v1835 = vunpack.c.0.s8 %v1834
        %v1836 = vlaneseq
        %v1837 = vshrl.u32 %v1836, 7
        %v1838 = vsub.s32 %v1835, %v1837
        %v1839 = vrot.slane %v1831, %v1838
        %v1841 = vunpack.c.l.s4 1983009808
        %v1842 = vunpack.c.0.s8 %v1841
        %v1843 = vlaneseq
        %v1844 = vshrl.u32 %v1843, 7
        %v1845 = vsub.s32 %v1842, %v1844
        %v1846 = vrot.slane %v1832, %v1845
        %v1847 = vcombine.low %v1563, %v1579
        %v1848 = vcombine.high %v1563, %v1579
        %v1850 = vunpack.c.l.s4 1983009808
        %v1851 = vunpack.c.0.s8 %v1850
        %v1852 = vlaneseq
        %v1853 = vshrl.u32 %v1852, 7
        %v1854 = vsub.s32 %v1851, %v1853
        %v1855 = vrot.slane %v1847, %v1854
        %v1857 = vunpack.c.l.s4 1983009808
        %v1858 = vunpack.c.0.s8 %v1857
        %v1859 = vlaneseq
        %v1860 = vshrl.u32 %v1859, 7
        %v1861 = vsub.s32 %v1858, %v1860
        %v1862 = vrot.slane %v1848, %v1861
        %v1863 = vcombine.low %v1571, %v1587
        %v1864 = vcombine.high %v1571, %v1587
        %v1866 = vunpack.c.l.s4 1983009808
        %v1867 = vunpack.c.0.s8 %v1866
        %v1868 = vlaneseq
        %v1869 = vshrl.u32 %v1868, 7
        %v1870 = vsub.s32 %v1867, %v1869
        %v1871 = vrot.slane %v1863, %v1870
        %v1873 = vunpack.c.l.s4 1983009808
        %v1874 = vunpack.c.0.s8 %v1873
        %v1875 = vlaneseq
        %v1876 = vshrl.u32 %v1875, 7
        %v1877 = vsub.s32 %v1874, %v1876
        %v1878 = vrot.slane %v1864, %v1877
        %v1879 = vcombine.low %v1823, %v1839
        %v1880 = vcombine.high %v1823, %v1839
        %v1882 = vunpack.c.l.s4 1934713408
        %v1883 = vunpack.c.0.s8 %v1882
        %v1884 = vlaneseq
        %v1885 = vshrl.u32 %v1884, 7
        %v1886 = vsub.s32 %v1883, %v1885
        %v1887 = vrot.slane %v1879, %v1886
        %v1889 = vunpack.c.l.s4 1934713408
        %v1890 = vunpack.c.0.s8 %v1889
        %v1891 = vlaneseq
        %v1892 = vshrl.u32 %v1891, 7
        %v1893 = vsub.s32 %v1890, %v1892
        %v1894 = vrot.slane %v1880, %v1893
        %v1895 = vcombine.low %v1830, %v1846
        %v1896 = vcombine.high %v1830, %v1846
        %v1898 = vunpack.c.l.s4 1934713408
        %v1899 = vunpack.c.0.s8 %v1898
        %v1900 = vlaneseq
        %v1901 = vshrl.u32 %v1900, 7
        %v1902 = vsub.s32 %v1899, %v1901
        %v1903 = vrot.slane %v1895, %v1902
        %v1905 = vunpack.c.l.s4 1934713408
        %v1906 = vunpack.c.0.s8 %v1905
        %v1907 = vlaneseq
        %v1908 = vshrl.u32 %v1907, 7
        %v1909 = vsub.s32 %v1906, %v1908
        %v1910 = vrot.slane %v1896, %v1909
        %v1911 = vcombine.low %v1855, %v1871
        %v1912 = vcombine.high %v1855, %v1871
        %v1914 = vunpack.c.l.s4 1934713408
        %v1915 = vunpack.c.0.s8 %v1914
        %v1916 = vlaneseq
        %v1917 = vshrl.u32 %v1916, 7
        %v1918 = vsub.s32 %v1915, %v1917
        %v1919 = vrot.slane %v1911, %v1918
        %v1921 = vunpack.c.l.s4 1934713408
        %v1922 = vunpack.c.0.s8 %v1921
        %v1923 = vlaneseq
        %v1924 = vshrl.u32 %v1923, 7
        %v1925 = vsub.s32 %v1922, %v1924
        %v1926 = vrot.slane %v1912, %v1925
        %v1927 = vcombine.low %v1862, %v1878
        %v1928 = vcombine.high %v1862, %v1878
        %v1930 = vunpack.c.l.s4 1934713408
        %v1931 = vunpack.c.0.s8 %v1930
        %v1932 = vlaneseq
        %v1933 = vshrl.u32 %v1932, 7
        %v1934 = vsub.s32 %v1931, %v1933
        %v1935 = vrot.slane %v1927, %v1934
        %v1937 = vunpack.c.l.s4 1934713408
        %v1938 = vunpack.c.0.s8 %v1937
        %v1939 = vlaneseq
        %v1940 = vshrl.u32 %v1939, 7
        %v1941 = vsub.s32 %v1938, %v1940
        %v1942 = vrot.slane %v1928, %v1941
        %v1943 = vcombine.low %v1887, %v1919
        %v1944 = vcombine.high %v1887, %v1919
        %v1945 = vcombine.low %v1894, %v1926
        %v1946 = vcombine.high %v1894, %v1926
        %v1947 = vcombine.low %v1903, %v1935
        %v1948 = vcombine.high %v1903, %v1935
        %v1949 = vcombine.low %v1910, %v1942
        %v1950 = vcombine.high %v1910, %v1942
        %v1951 = vcombine.low %v1539, %v1551
        %v1952 = vcombine.high %v1539, %v1551
        %v1954 = vunpack.c.l.s4 1983009808
        %v1955 = vunpack.c.0.s8 %v1954
        %v1956 = vlaneseq
        %v1957 = vshrl.u32 %v1956, 7
        %v1958 = vsub.s32 %v1955, %v1957
        %v1959 = vrot.slane %v1951, %v1958
        %v1961 = vunpack.c.l.s4 1983009808
        %v1962 = vunpack.c.0.s8 %v1961
        %v1963 = vlaneseq
        %v1964 = vshrl.u32 %v1963, 7
        %v1965 = vsub.s32 %v1962, %v1964
        %v1966 = vrot.slane %v1952, %v1965
        %v1967 = vcombine.low %v1543, %v1559
        %v1968 = vcombine.high %v1543, %v1559
        %v1970 = vunpack.c.l.s4 1983009808
        %v1971 = vunpack.c.0.s8 %v1970
        %v1972 = vlaneseq
        %v1973 = vshrl.u32 %v1972, 7
        %v1974 = vsub.s32 %v1971, %v1973
        %v1975 = vrot.slane %v1967, %v1974
        %v1977 = vunpack.c.l.s4 1983009808
        %v1978 = vunpack.c.0.s8 %v1977
        %v1979 = vlaneseq
        %v1980 = vshrl.u32 %v1979, 7
        %v1981 = vsub.s32 %v1978, %v1980
        %v1982 = vrot.slane %v1968, %v1981
        %v1983 = vcombine.low %v1567, %v1583
        %v1984 = vcombine.high %v1567, %v1583
        %v1986 = vunpack.c.l.s4 1983009808
        %v1987 = vunpack.c.0.s8 %v1986
        %v1988 = vlaneseq
        %v1989 = vshrl.u32 %v1988, 7
        %v1990 = vsub.s32 %v1987, %v1989
        %v1991 = vrot.slane %v1983, %v1990
        %v1993 = vunpack.c.l.s4 1983009808
        %v1994 = vunpack.c.0.s8 %v1993
        %v1995 = vlaneseq
        %v1996 = vshrl.u32 %v1995, 7
        %v1997 = vsub.s32 %v1994, %v1996
        %v1998 = vrot.slane %v1984, %v1997
        %v1999 = vcombine.low %v1575, %v1591
        %v2000 = vcombine.high %v1575, %v1591
        %v2002 = vunpack.c.l.s4 1983009808
        %v2003 = vunpack.c.0.s8 %v2002
        %v2004 = vlaneseq
        %v2005 = vshrl.u32 %v2004, 7
        %v2006 = vsub.s32 %v2003, %v2005
        %v2007 = vrot.slane %v1999, %v2006
        %v2009 = vunpack.c.l.s4 1983009808
        %v2010 = vunpack.c.0.s8 %v2009
        %v2011 = vlaneseq
        %v2012 = vshrl.u32 %v2011, 7
        %v2013 = vsub.s32 %v2010, %v2012
        %v2014 = vrot.slane %v2000, %v2013
        %v2015 = vcombine.low %v1959, %v1975
        %v2016 = vcombine.high %v1959, %v1975
        %v2018 = vunpack.c.l.s4 1934713408
        %v2019 = vunpack.c.0.s8 %v2018
        %v2020 = vlaneseq
        %v2021 = vshrl.u32 %v2020, 7
        %v2022 = vsub.s32 %v2019, %v2021
        %v2023 = vrot.slane %v2015, %v2022
        %v2025 = vunpack.c.l.s4 1934713408
        %v2026 = vunpack.c.0.s8 %v2025
        %v2027 = vlaneseq
        %v2028 = vshrl.u32 %v2027, 7
        %v2029 = vsub.s32 %v2026, %v2028
        %v2030 = vrot.slane %v2016, %v2029
        %v2031 = vcombine.low %v1966, %v1982
        %v2032 = vcombine.high %v1966, %v1982
        %v2034 = vunpack.c.l.s4 1934713408
        %v2035 = vunpack.c.0.s8 %v2034
        %v2036 = vlaneseq
        %v2037 = vshrl.u32 %v2036, 7
        %v2038 = vsub.s32 %v2035, %v2037
        %v2039 = vrot.slane %v2031, %v2038
        %v2041 = vunpack.c.l.s4 1934713408
        %v2042 = vunpack.c.0.s8 %v2041
        %v2043 = vlaneseq
        %v2044 = vshrl.u32 %v2043, 7
        %v2045 = vsub.s32 %v2042, %v2044
        %v2046 = vrot.slane %v2032, %v2045
        %v2047 = vcombine.low %v1991, %v2007
        %v2048 = vcombine.high %v1991, %v2007
        %v2050 = vunpack.c.l.s4 1934713408
        %v2051 = vunpack.c.0.s8 %v2050
        %v2052 = vlaneseq
        %v2053 = vshrl.u32 %v2052, 7
        %v2054 = vsub.s32 %v2051, %v2053
        %v2055 = vrot.slane %v2047, %v2054
        %v2057 = vunpack.c.l.s4 1934713408
        %v2058 = vunpack.c.0.s8 %v2057
        %v2059 = vlaneseq
        %v2060 = vshrl.u32 %v2059, 7
        %v2061 = vsub.s32 %v2058, %v2060
        %v2062 = vrot.slane %v2048, %v2061
        %v2063 = vcombine.low %v1998, %v2014
        %v2064 = vcombine.high %v1998, %v2014
        %v2066 = vunpack.c.l.s4 1934713408
        %v2067 = vunpack.c.0.s8 %v2066
        %v2068 = vlaneseq
        %v2069 = vshrl.u32 %v2068, 7
        %v2070 = vsub.s32 %v2067, %v2069
        %v2071 = vrot.slane %v2063, %v2070
        %v2073 = vunpack.c.l.s4 1934713408
        %v2074 = vunpack.c.0.s8 %v2073
        %v2075 = vlaneseq
        %v2076 = vshrl.u32 %v2075, 7
        %v2077 = vsub.s32 %v2074, %v2076
        %v2078 = vrot.slane %v2064, %v2077
        %v2079 = vcombine.low %v2023, %v2055
        %v2080 = vcombine.high %v2023, %v2055
        %v2081 = vcombine.low %v2030, %v2062
        %v2082 = vcombine.high %v2030, %v2062
        %v2083 = vcombine.low %v2039, %v2071
        %v2084 = vcombine.high %v2039, %v2071
        %v2085 = vcombine.low %v2046, %v2078
        %v2086 = vcombine.high %v2046, %v2078
        %v2087 = vcombine.low %v1595, %v1611
        %v2088 = vcombine.high %v1595, %v1611
        %v2090 = vunpack.c.l.s4 1983009808
        %v2091 = vunpack.c.0.s8 %v2090
        %v2092 = vlaneseq
        %v2093 = vshrl.u32 %v2092, 7
        %v2094 = vsub.s32 %v2091, %v2093
        %v2095 = vrot.slane %v2087, %v2094
        %v2097 = vunpack.c.l.s4 1983009808
        %v2098 = vunpack.c.0.s8 %v2097
        %v2099 = vlaneseq
        %v2100 = vshrl.u32 %v2099, 7
        %v2101 = vsub.s32 %v2098, %v2100
        %v2102 = vrot.slane %v2088, %v2101
        %v2103 = vcombine.low %v1603, %v1619
        %v2104 = vcombine.high %v1603, %v1619
        %v2106 = vunpack.c.l.s4 1983009808
        %v2107 = vunpack.c.0.s8 %v2106
        %v2108 = vlaneseq
        %v2109 = vshrl.u32 %v2108, 7
        %v2110 = vsub.s32 %v2107, %v2109
        %v2111 = vrot.slane %v2103, %v2110
        %v2113 = vunpack.c.l.s4 1983009808
        %v2114 = vunpack.c.0.s8 %v2113
        %v2115 = vlaneseq
        %v2116 = vshrl.u32 %v2115, 7
        %v2117 = vsub.s32 %v2114, %v2116
        %v2118 = vrot.slane %v2104, %v2117
        %v2119 = vcombine.low %v1627, %v1643
        %v2120 = vcombine.high %v1627, %v1643
        %v2122 = vunpack.c.l.s4 1983009808
        %v2123 = vunpack.c.0.s8 %v2122
        %v2124 = vlaneseq
        %v2125 = vshrl.u32 %v2124, 7
        %v2126 = vsub.s32 %v2123, %v2125
        %v2127 = vrot.slane %v2119, %v2126
        %v2129 = vunpack.c.l.s4 1983009808
        %v2130 = vunpack.c.0.s8 %v2129
        %v2131 = vlaneseq
        %v2132 = vshrl.u32 %v2131, 7
        %v2133 = vsub.s32 %v2130, %v2132
        %v2134 = vrot.slane %v2120, %v2133
        %v2135 = vcombine.low %v1635, %v1651
        %v2136 = vcombine.high %v1635, %v1651
        %v2138 = vunpack.c.l.s4 1983009808
        %v2139 = vunpack.c.0.s8 %v2138
        %v2140 = vlaneseq
        %v2141 = vshrl.u32 %v2140, 7
        %v2142 = vsub.s32 %v2139, %v2141
        %v2143 = vrot.slane %v2135, %v2142
        %v2145 = vunpack.c.l.s4 1983009808
        %v2146 = vunpack.c.0.s8 %v2145
        %v2147 = vlaneseq
        %v2148 = vshrl.u32 %v2147, 7
        %v2149 = vsub.s32 %v2146, %v2148
        %v2150 = vrot.slane %v2136, %v2149
        %v2151 = vcombine.low %v2095, %v2111
        %v2152 = vcombine.high %v2095, %v2111
        %v2154 = vunpack.c.l.s4 1934713408
        %v2155 = vunpack.c.0.s8 %v2154
        %v2156 = vlaneseq
        %v2157 = vshrl.u32 %v2156, 7
        %v2158 = vsub.s32 %v2155, %v2157
        %v2159 = vrot.slane %v2151, %v2158
        %v2161 = vunpack.c.l.s4 1934713408
        %v2162 = vunpack.c.0.s8 %v2161
        %v2163 = vlaneseq
        %v2164 = vshrl.u32 %v2163, 7
        %v2165 = vsub.s32 %v2162, %v2164
        %v2166 = vrot.slane %v2152, %v2165
        %v2167 = vcombine.low %v2102, %v2118
        %v2168 = vcombine.high %v2102, %v2118
        %v2170 = vunpack.c.l.s4 1934713408
        %v2171 = vunpack.c.0.s8 %v2170
        %v2172 = vlaneseq
        %v2173 = vshrl.u32 %v2172, 7
        %v2174 = vsub.s32 %v2171, %v2173
        %v2175 = vrot.slane %v2167, %v2174
        %v2177 = vunpack.c.l.s4 1934713408
        %v2178 = vunpack.c.0.s8 %v2177
        %v2179 = vlaneseq
        %v2180 = vshrl.u32 %v2179, 7
        %v2181 = vsub.s32 %v2178, %v2180
        %v2182 = vrot.slane %v2168, %v2181
        %v2183 = vcombine.low %v2127, %v2143
        %v2184 = vcombine.high %v2127, %v2143
        %v2186 = vunpack.c.l.s4 1934713408
        %v2187 = vunpack.c.0.s8 %v2186
        %v2188 = vlaneseq
        %v2189 = vshrl.u32 %v2188, 7
        %v2190 = vsub.s32 %v2187, %v2189
        %v2191 = vrot.slane %v2183, %v2190
        %v2193 = vunpack.c.l.s4 1934713408
        %v2194 = vunpack.c.0.s8 %v2193
        %v2195 = vlaneseq
        %v2196 = vshrl.u32 %v2195, 7
        %v2197 = vsub.s32 %v2194, %v2196
        %v2198 = vrot.slane %v2184, %v2197
        %v2199 = vcombine.low %v2134, %v2150
        %v2200 = vcombine.high %v2134, %v2150
        %v2202 = vunpack.c.l.s4 1934713408
        %v2203 = vunpack.c.0.s8 %v2202
        %v2204 = vlaneseq
        %v2205 = vshrl.u32 %v2204, 7
        %v2206 = vsub.s32 %v2203, %v2205
        %v2207 = vrot.slane %v2199, %v2206
        %v2209 = vunpack.c.l.s4 1934713408
        %v2210 = vunpack.c.0.s8 %v2209
        %v2211 = vlaneseq
        %v2212 = vshrl.u32 %v2211, 7
        %v2213 = vsub.s32 %v2210, %v2212
        %v2214 = vrot.slane %v2200, %v2213
        %v2215 = vcombine.low %v2159, %v2191
        %v2216 = vcombine.high %v2159, %v2191
        %v2217 = vcombine.low %v2166, %v2198
        %v2218 = vcombine.high %v2166, %v2198
        %v2219 = vcombine.low %v2175, %v2207
        %v2220 = vcombine.high %v2175, %v2207
        %v2221 = vcombine.low %v2182, %v2214
        %v2222 = vcombine.high %v2182, %v2214
        %v2223 = vcombine.low %v1599, %v1615
        %v2224 = vcombine.high %v1599, %v1615
        %v2226 = vunpack.c.l.s4 1983009808
        %v2227 = vunpack.c.0.s8 %v2226
        %v2228 = vlaneseq
        %v2229 = vshrl.u32 %v2228, 7
        %v2230 = vsub.s32 %v2227, %v2229
        %v2231 = vrot.slane %v2223, %v2230
        %v2233 = vunpack.c.l.s4 1983009808
        %v2234 = vunpack.c.0.s8 %v2233
        %v2235 = vlaneseq
        %v2236 = vshrl.u32 %v2235, 7
        %v2237 = vsub.s32 %v2234, %v2236
        %v2238 = vrot.slane %v2224, %v2237
        %v2239 = vcombine.low %v1607, %v1623
        %v2240 = vcombine.high %v1607, %v1623
        %v2242 = vunpack.c.l.s4 1983009808
        %v2243 = vunpack.c.0.s8 %v2242
        %v2244 = vlaneseq
        %v2245 = vshrl.u32 %v2244, 7
        %v2246 = vsub.s32 %v2243, %v2245
        %v2247 = vrot.slane %v2239, %v2246
        %v2249 = vunpack.c.l.s4 1983009808
        %v2250 = vunpack.c.0.s8 %v2249
        %v2251 = vlaneseq
        %v2252 = vshrl.u32 %v2251, 7
        %v2253 = vsub.s32 %v2250, %v2252
        %v2254 = vrot.slane %v2240, %v2253
        %v2255 = vcombine.low %v1631, %v1647
        %v2256 = vcombine.high %v1631, %v1647
        %v2258 = vunpack.c.l.s4 1983009808
        %v2259 = vunpack.c.0.s8 %v2258
        %v2260 = vlaneseq
        %v2261 = vshrl.u32 %v2260, 7
        %v2262 = vsub.s32 %v2259, %v2261
        %v2263 = vrot.slane %v2255, %v2262
        %v2265 = vunpack.c.l.s4 1983009808
        %v2266 = vunpack.c.0.s8 %v2265
        %v2267 = vlaneseq
        %v2268 = vshrl.u32 %v2267, 7
        %v2269 = vsub.s32 %v2266, %v2268
        %v2270 = vrot.slane %v2256, %v2269
        %v2271 = vcombine.low %v1639, %v1655
        %v2272 = vcombine.high %v1639, %v1655
        %v2274 = vunpack.c.l.s4 1983009808
        %v2275 = vunpack.c.0.s8 %v2274
        %v2276 = vlaneseq
        %v2277 = vshrl.u32 %v2276, 7
        %v2278 = vsub.s32 %v2275, %v2277
        %v2279 = vrot.slane %v2271, %v2278
        %v2281 = vunpack.c.l.s4 1983009808
        %v2282 = vunpack.c.0.s8 %v2281
        %v2283 = vlaneseq
        %v2284 = vshrl.u32 %v2283, 7
        %v2285 = vsub.s32 %v2282, %v2284
        %v2286 = vrot.slane %v2272, %v2285
        %v2287 = vcombine.low %v2231, %v2247
        %v2288 = vcombine.high %v2231, %v2247
        %v2290 = vunpack.c.l.s4 1934713408
        %v2291 = vunpack.c.0.s8 %v2290
        %v2292 = vlaneseq
        %v2293 = vshrl.u32 %v2292, 7
        %v2294 = vsub.s32 %v2291, %v2293
        %v2295 = vrot.slane %v2287, %v2294
        %v2297 = vunpack.c.l.s4 1934713408
        %v2298 = vunpack.c.0.s8 %v2297
        %v2299 = vlaneseq
        %v2300 = vshrl.u32 %v2299, 7
        %v2301 = vsub.s32 %v2298, %v2300
        %v2302 = vrot.slane %v2288, %v2301
        %v2303 = vcombine.low %v2238, %v2254
        %v2304 = vcombine.high %v2238, %v2254
        %v2306 = vunpack.c.l.s4 1934713408
        %v2307 = vunpack.c.0.s8 %v2306
        %v2308 = vlaneseq
        %v2309 = vshrl.u32 %v2308, 7
        %v2310 = vsub.s32 %v2307, %v2309
        %v2311 = vrot.slane %v2303, %v2310
        %v2313 = vunpack.c.l.s4 1934713408
        %v2314 = vunpack.c.0.s8 %v2313
        %v2315 = vlaneseq
        %v2316 = vshrl.u32 %v2315, 7
        %v2317 = vsub.s32 %v2314, %v2316
        %v2318 = vrot.slane %v2304, %v2317
        %v2319 = vcombine.low %v2263, %v2279
        %v2320 = vcombine.high %v2263, %v2279
        %v2322 = vunpack.c.l.s4 1934713408
        %v2323 = vunpack.c.0.s8 %v2322
        %v2324 = vlaneseq
        %v2325 = vshrl.u32 %v2324, 7
        %v2326 = vsub.s32 %v2323, %v2325
        %v2327 = vrot.slane %v2319, %v2326
        %v2329 = vunpack.c.l.s4 1934713408
        %v2330 = vunpack.c.0.s8 %v2329
        %v2331 = vlaneseq
        %v2332 = vshrl.u32 %v2331, 7
        %v2333 = vsub.s32 %v2330, %v2332
        %v2334 = vrot.slane %v2320, %v2333
        %v2335 = vcombine.low %v2270, %v2286
        %v2336 = vcombine.high %v2270, %v2286
        %v2338 = vunpack.c.l.s4 1934713408
        %v2339 = vunpack.c.0.s8 %v2338
        %v2340 = vlaneseq
        %v2341 = vshrl.u32 %v2340, 7
        %v2342 = vsub.s32 %v2339, %v2341
        %v2343 = vrot.slane %v2335, %v2342
        %v2345 = vunpack.c.l.s4 1934713408
        %v2346 = vunpack.c.0.s8 %v2345
        %v2347 = vlaneseq
        %v2348 = vshrl.u32 %v2347, 7
        %v2349 = vsub.s32 %v2346, %v2348
        %v2350 = vrot.slane %v2336, %v2349
        %v2351 = vcombine.low %v2295, %v2327
        %v2352 = vcombine.high %v2295, %v2327
        %v2353 = vcombine.low %v2302, %v2334
        %v2354 = vcombine.high %v2302, %v2334
        %v2355 = vcombine.low %v2311, %v2343
        %v2356 = vcombine.high %v2311, %v2343
        %v2357 = vcombine.low %v2318, %v2350
        %v2358 = vcombine.high %v2318, %v2350
        %v2359 = vcombine.high %v1659, %v1674
        %v2361 = vunpack.c.l.s4 1983009808
        %v2362 = vunpack.c.0.s8 %v2361
        %v2363 = vlaneseq
        %v2364 = vshrl.u32 %v2363, 7
        %v2365 = vsub.s32 %v2362, %v2364
        %v2366 = vrot.slane %v1659, %v2365
        %v2368 = vunpack.c.l.s4 1983009808
        %v2369 = vunpack.c.0.s8 %v2368
        %v2370 = vlaneseq
        %v2371 = vshrl.u32 %v2370, 7
        %v2372 = vsub.s32 %v2369, %v2371
        %v2373 = vrot.slane %v2359, %v2372
        %v2374 = vcombine.high %v1667, %v1674
        %v2376 = vunpack.c.l.s4 1983009808
        %v2377 = vunpack.c.0.s8 %v2376
        %v2378 = vlaneseq
        %v2379 = vshrl.u32 %v2378, 7
        %v2380 = vsub.s32 %v2377, %v2379
        %v2381 = vrot.slane %v1667, %v2380
        %v2383 = vunpack.c.l.s4 1983009808
        %v2384 = vunpack.c.0.s8 %v2383
        %v2385 = vlaneseq
        %v2386 = vshrl.u32 %v2385, 7
        %v2387 = vsub.s32 %v2384, %v2386
        %v2388 = vrot.slane %v2374, %v2387
        %v2389 = vcombine.low %v2366, %v2381
        %v2390 = vcombine.high %v2366, %v2381
        %v2392 = vunpack.c.l.s4 1934713408
        %v2393 = vunpack.c.0.s8 %v2392
        %v2394 = vlaneseq
        %v2395 = vshrl.u32 %v2394, 7
        %v2396 = vsub.s32 %v2393, %v2395
        %v2397 = vrot.slane %v2389, %v2396
        %v2399 = vunpack.c.l.s4 1934713408
        %v2400 = vunpack.c.0.s8 %v2399
        %v2401 = vlaneseq
        %v2402 = vshrl.u32 %v2401, 7
        %v2403 = vsub.s32 %v2400, %v2402
        %v2404 = vrot.slane %v2390, %v2403
        %v2405 = vcombine.low %v2373, %v2388
        %v2406 = vcombine.high %v2373, %v2388
        %v2408 = vunpack.c.l.s4 1934713408
        %v2409 = vunpack.c.0.s8 %v2408
        %v2410 = vlaneseq
        %v2411 = vshrl.u32 %v2410, 7
        %v2412 = vsub.s32 %v2409, %v2411
        %v2413 = vrot.slane %v2405, %v2412
        %v2415 = vunpack.c.l.s4 1934713408
        %v2416 = vunpack.c.0.s8 %v2415
        %v2417 = vlaneseq
        %v2418 = vshrl.u32 %v2417, 7
        %v2419 = vsub.s32 %v2416, %v2418
        %v2420 = vrot.slane %v2406, %v2419
        %v2421 = vcombine.high %v2397, 0
        %v2422 = vcombine.high %v2404, 0
        %v2423 = vcombine.high %v2413, 0
        %v2424 = vcombine.high %v2420, 0
        %v2425 = vcombine.high %v1663, %v1677
        %v2427 = vunpack.c.l.s4 1983009808
        %v2428 = vunpack.c.0.s8 %v2427
        %v2429 = vlaneseq
        %v2430 = vshrl.u32 %v2429, 7
        %v2431 = vsub.s32 %v2428, %v2430
        %v2432 = vrot.slane %v1663, %v2431
        %v2434 = vunpack.c.l.s4 1983009808
        %v2435 = vunpack.c.0.s8 %v2434
        %v2436 = vlaneseq
        %v2437 = vshrl.u32 %v2436, 7
        %v2438 = vsub.s32 %v2435, %v2437
        %v2439 = vrot.slane %v2425, %v2438
        %v2440 = vcombine.high %v1671, %v1677
        %v2442 = vunpack.c.l.s4 1983009808
        %v2443 = vunpack.c.0.s8 %v2442
        %v2444 = vlaneseq
        %v2445 = vshrl.u32 %v2444, 7
        %v2446 = vsub.s32 %v2443, %v2445
        %v2447 = vrot.slane %v1671, %v2446
        %v2449 = vunpack.c.l.s4 1983009808
        %v2450 = vunpack.c.0.s8 %v2449
        %v2451 = vlaneseq
        %v2452 = vshrl.u32 %v2451, 7
        %v2453 = vsub.s32 %v2450, %v2452
        %v2454 = vrot.slane %v2440, %v2453
        %v2455 = vcombine.low %v2432, %v2447
        %v2456 = vcombine.high %v2432, %v2447
        %v2458 = vunpack.c.l.s4 1934713408
        %v2459 = vunpack.c.0.s8 %v2458
        %v2460 = vlaneseq
        %v2461 = vshrl.u32 %v2460, 7
        %v2462 = vsub.s32 %v2459, %v2461
        %v2463 = vrot.slane %v2455, %v2462
        %v2465 = vunpack.c.l.s4 1934713408
        %v2466 = vunpack.c.0.s8 %v2465
        %v2467 = vlaneseq
        %v2468 = vshrl.u32 %v2467, 7
        %v2469 = vsub.s32 %v2466, %v2468
        %v2470 = vrot.slane %v2456, %v2469
        %v2471 = vcombine.low %v2439, %v2454
        %v2472 = vcombine.high %v2439, %v2454
        %v2474 = vunpack.c.l.s4 1934713408
        %v2475 = vunpack.c.0.s8 %v2474
        %v2476 = vlaneseq
        %v2477 = vshrl.u32 %v2476, 7
        %v2478 = vsub.s32 %v2475, %v2477
        %v2479 = vrot.slane %v2471, %v2478
        %v2481 = vunpack.c.l.s4 1934713408
        %v2482 = vunpack.c.0.s8 %v2481
        %v2483 = vlaneseq
        %v2484 = vshrl.u32 %v2483, 7
        %v2485 = vsub.s32 %v2482, %v2484
        %v2486 = vrot.slane %v2472, %v2485
        %v2487 = vcombine.high %v2463, 0
        %v2488 = vcombine.high %v2470, 0
        %v2489 = vcombine.high %v2479, 0
        %v2490 = vcombine.high %v2486, 0
        %v2491 = vcombine.low %v1679, %v1689
        %v2492 = vcombine.high %v1679, %v1689
        %v2494 = vunpack.c.l.s4 1983009808
        %v2495 = vunpack.c.0.s8 %v2494
        %v2496 = vlaneseq
        %v2497 = vshrl.u32 %v2496, 7
        %v2498 = vsub.s32 %v2495, %v2497
        %v2499 = vrot.slane %v2491, %v2498
        %v2501 = vunpack.c.l.s4 1983009808
        %v2502 = vunpack.c.0.s8 %v2501
        %v2503 = vlaneseq
        %v2504 = vshrl.u32 %v2503, 7
        %v2505 = vsub.s32 %v2502, %v2504
        %v2506 = vrot.slane %v2492, %v2505
        %v2507 = vcombine.low %v1683, %v1697
        %v2508 = vcombine.high %v1683, %v1697
        %v2510 = vunpack.c.l.s4 1983009808
        %v2511 = vunpack.c.0.s8 %v2510
        %v2512 = vlaneseq
        %v2513 = vshrl.u32 %v2512, 7
        %v2514 = vsub.s32 %v2511, %v2513
        %v2515 = vrot.slane %v2507, %v2514
        %v2517 = vunpack.c.l.s4 1983009808
        %v2518 = vunpack.c.0.s8 %v2517
        %v2519 = vlaneseq
        %v2520 = vshrl.u32 %v2519, 7
        %v2521 = vsub.s32 %v2518, %v2520
        %v2522 = vrot.slane %v2508, %v2521
        %v2523 = vcombine.low %v1705, %v1721
        %v2524 = vcombine.high %v1705, %v1721
        %v2526 = vunpack.c.l.s4 1983009808
        %v2527 = vunpack.c.0.s8 %v2526
        %v2528 = vlaneseq
        %v2529 = vshrl.u32 %v2528, 7
        %v2530 = vsub.s32 %v2527, %v2529
        %v2531 = vrot.slane %v2523, %v2530
        %v2533 = vunpack.c.l.s4 1983009808
        %v2534 = vunpack.c.0.s8 %v2533
        %v2535 = vlaneseq
        %v2536 = vshrl.u32 %v2535, 7
        %v2537 = vsub.s32 %v2534, %v2536
        %v2538 = vrot.slane %v2524, %v2537
        %v2539 = vcombine.low %v1713, %v1729
        %v2540 = vcombine.high %v1713, %v1729
        %v2542 = vunpack.c.l.s4 1983009808
        %v2543 = vunpack.c.0.s8 %v2542
        %v2544 = vlaneseq
        %v2545 = vshrl.u32 %v2544, 7
        %v2546 = vsub.s32 %v2543, %v2545
        %v2547 = vrot.slane %v2539, %v2546
        %v2549 = vunpack.c.l.s4 1983009808
        %v2550 = vunpack.c.0.s8 %v2549
        %v2551 = vlaneseq
        %v2552 = vshrl.u32 %v2551, 7
        %v2553 = vsub.s32 %v2550, %v2552
        %v2554 = vrot.slane %v2540, %v2553
        %v2555 = vcombine.low %v2499, %v2515
        %v2556 = vcombine.high %v2499, %v2515
        %v2558 = vunpack.c.l.s4 1934713408
        %v2559 = vunpack.c.0.s8 %v2558
        %v2560 = vlaneseq
        %v2561 = vshrl.u32 %v2560, 7
        %v2562 = vsub.s32 %v2559, %v2561
        %v2563 = vrot.slane %v2555, %v2562
        %v2565 = vunpack.c.l.s4 1934713408
        %v2566 = vunpack.c.0.s8 %v2565
        %v2567 = vlaneseq
        %v2568 = vshrl.u32 %v2567, 7
        %v2569 = vsub.s32 %v2566, %v2568
        %v2570 = vrot.slane %v2556, %v2569
        %v2571 = vcombine.low %v2506, %v2522
        %v2572 = vcombine.high %v2506, %v2522
        %v2574 = vunpack.c.l.s4 1934713408
        %v2575 = vunpack.c.0.s8 %v2574
        %v2576 = vlaneseq
        %v2577 = vshrl.u32 %v2576, 7
        %v2578 = vsub.s32 %v2575, %v2577
        %v2579 = vrot.slane %v2571, %v2578
        %v2581 = vunpack.c.l.s4 1934713408
        %v2582 = vunpack.c.0.s8 %v2581
        %v2583 = vlaneseq
        %v2584 = vshrl.u32 %v2583, 7
        %v2585 = vsub.s32 %v2582, %v2584
        %v2586 = vrot.slane %v2572, %v2585
        %v2587 = vcombine.low %v2531, %v2547
        %v2588 = vcombine.high %v2531, %v2547
        %v2590 = vunpack.c.l.s4 1934713408
        %v2591 = vunpack.c.0.s8 %v2590
        %v2592 = vlaneseq
        %v2593 = vshrl.u32 %v2592, 7
        %v2594 = vsub.s32 %v2591, %v2593
        %v2595 = vrot.slane %v2587, %v2594
        %v2597 = vunpack.c.l.s4 1934713408
        %v2598 = vunpack.c.0.s8 %v2597
        %v2599 = vlaneseq
        %v2600 = vshrl.u32 %v2599, 7
        %v2601 = vsub.s32 %v2598, %v2600
        %v2602 = vrot.slane %v2588, %v2601
        %v2603 = vcombine.low %v2538, %v2554
        %v2604 = vcombine.high %v2538, %v2554
        %v2606 = vunpack.c.l.s4 1934713408
        %v2607 = vunpack.c.0.s8 %v2606
        %v2608 = vlaneseq
        %v2609 = vshrl.u32 %v2608, 7
        %v2610 = vsub.s32 %v2607, %v2609
        %v2611 = vrot.slane %v2603, %v2610
        %v2613 = vunpack.c.l.s4 1934713408
        %v2614 = vunpack.c.0.s8 %v2613
        %v2615 = vlaneseq
        %v2616 = vshrl.u32 %v2615, 7
        %v2617 = vsub.s32 %v2614, %v2616
        %v2618 = vrot.slane %v2604, %v2617
        %v2619 = vcombine.low %v2563, %v2595
        %v2620 = vcombine.high %v2563, %v2595
        %v2621 = vcombine.low %v2570, %v2602
        %v2622 = vcombine.high %v2570, %v2602
        %v2623 = vcombine.low %v2579, %v2611
        %v2624 = vcombine.high %v2579, %v2611
        %v2625 = vcombine.low %v2586, %v2618
        %v2626 = vcombine.high %v2586, %v2618
        %v2627 = vcombine.low %v1681, %v1693
        %v2628 = vcombine.high %v1681, %v1693
        %v2630 = vunpack.c.l.s4 1983009808
        %v2631 = vunpack.c.0.s8 %v2630
        %v2632 = vlaneseq
        %v2633 = vshrl.u32 %v2632, 7
        %v2634 = vsub.s32 %v2631, %v2633
        %v2635 = vrot.slane %v2627, %v2634
        %v2637 = vunpack.c.l.s4 1983009808
        %v2638 = vunpack.c.0.s8 %v2637
        %v2639 = vlaneseq
        %v2640 = vshrl.u32 %v2639, 7
        %v2641 = vsub.s32 %v2638, %v2640
        %v2642 = vrot.slane %v2628, %v2641
        %v2643 = vcombine.low %v1685, %v1701
        %v2644 = vcombine.high %v1685, %v1701
        %v2646 = vunpack.c.l.s4 1983009808
        %v2647 = vunpack.c.0.s8 %v2646
        %v2648 = vlaneseq
        %v2649 = vshrl.u32 %v2648, 7
        %v2650 = vsub.s32 %v2647, %v2649
        %v2651 = vrot.slane %v2643, %v2650
        %v2653 = vunpack.c.l.s4 1983009808
        %v2654 = vunpack.c.0.s8 %v2653
        %v2655 = vlaneseq
        %v2656 = vshrl.u32 %v2655, 7
        %v2657 = vsub.s32 %v2654, %v2656
        %v2658 = vrot.slane %v2644, %v2657
        %v2659 = vcombine.low %v1709, %v1725
        %v2660 = vcombine.high %v1709, %v1725
        %v2662 = vunpack.c.l.s4 1983009808
        %v2663 = vunpack.c.0.s8 %v2662
        %v2664 = vlaneseq
        %v2665 = vshrl.u32 %v2664, 7
        %v2666 = vsub.s32 %v2663, %v2665
        %v2667 = vrot.slane %v2659, %v2666
        %v2669 = vunpack.c.l.s4 1983009808
        %v2670 = vunpack.c.0.s8 %v2669
        %v2671 = vlaneseq
        %v2672 = vshrl.u32 %v2671, 7
        %v2673 = vsub.s32 %v2670, %v2672
        %v2674 = vrot.slane %v2660, %v2673
        %v2675 = vcombine.low %v1717, %v1733
        %v2676 = vcombine.high %v1717, %v1733
        %v2678 = vunpack.c.l.s4 1983009808
        %v2679 = vunpack.c.0.s8 %v2678
        %v2680 = vlaneseq
        %v2681 = vshrl.u32 %v2680, 7
        %v2682 = vsub.s32 %v2679, %v2681
        %v2683 = vrot.slane %v2675, %v2682
        %v2685 = vunpack.c.l.s4 1983009808
        %v2686 = vunpack.c.0.s8 %v2685
        %v2687 = vlaneseq
        %v2688 = vshrl.u32 %v2687, 7
        %v2689 = vsub.s32 %v2686, %v2688
        %v2690 = vrot.slane %v2676, %v2689
        %v2691 = vcombine.low %v2635, %v2651
        %v2692 = vcombine.high %v2635, %v2651
        %v2694 = vunpack.c.l.s4 1934713408
        %v2695 = vunpack.c.0.s8 %v2694
        %v2696 = vlaneseq
        %v2697 = vshrl.u32 %v2696, 7
        %v2698 = vsub.s32 %v2695, %v2697
        %v2699 = vrot.slane %v2691, %v2698
        %v2701 = vunpack.c.l.s4 1934713408
        %v2702 = vunpack.c.0.s8 %v2701
        %v2703 = vlaneseq
        %v2704 = vshrl.u32 %v2703, 7
        %v2705 = vsub.s32 %v2702, %v2704
        %v2706 = vrot.slane %v2692, %v2705
        %v2707 = vcombine.low %v2642, %v2658
        %v2708 = vcombine.high %v2642, %v2658
        %v2710 = vunpack.c.l.s4 1934713408
        %v2711 = vunpack.c.0.s8 %v2710
        %v2712 = vlaneseq
        %v2713 = vshrl.u32 %v2712, 7
        %v2714 = vsub.s32 %v2711, %v2713
        %v2715 = vrot.slane %v2707, %v2714
        %v2717 = vunpack.c.l.s4 1934713408
        %v2718 = vunpack.c.0.s8 %v2717
        %v2719 = vlaneseq
        %v2720 = vshrl.u32 %v2719, 7
        %v2721 = vsub.s32 %v2718, %v2720
        %v2722 = vrot.slane %v2708, %v2721
        %v2723 = vcombine.low %v2667, %v2683
        %v2724 = vcombine.high %v2667, %v2683
        %v2726 = vunpack.c.l.s4 1934713408
        %v2727 = vunpack.c.0.s8 %v2726
        %v2728 = vlaneseq
        %v2729 = vshrl.u32 %v2728, 7
        %v2730 = vsub.s32 %v2727, %v2729
        %v2731 = vrot.slane %v2723, %v2730
        %v2733 = vunpack.c.l.s4 1934713408
        %v2734 = vunpack.c.0.s8 %v2733
        %v2735 = vlaneseq
        %v2736 = vshrl.u32 %v2735, 7
        %v2737 = vsub.s32 %v2734, %v2736
        %v2738 = vrot.slane %v2724, %v2737
        %v2739 = vcombine.low %v2674, %v2690
        %v2740 = vcombine.high %v2674, %v2690
        %v2742 = vunpack.c.l.s4 1934713408
        %v2743 = vunpack.c.0.s8 %v2742
        %v2744 = vlaneseq
        %v2745 = vshrl.u32 %v2744, 7
        %v2746 = vsub.s32 %v2743, %v2745
        %v2747 = vrot.slane %v2739, %v2746
        %v2749 = vunpack.c.l.s4 1934713408
        %v2750 = vunpack.c.0.s8 %v2749
        %v2751 = vlaneseq
        %v2752 = vshrl.u32 %v2751, 7
        %v2753 = vsub.s32 %v2750, %v2752
        %v2754 = vrot.slane %v2740, %v2753
        %v2755 = vcombine.low %v2699, %v2731
        %v2756 = vcombine.high %v2699, %v2731
        %v2757 = vcombine.low %v2706, %v2738
        %v2758 = vcombine.high %v2706, %v2738
        %v2759 = vcombine.low %v2715, %v2747
        %v2760 = vcombine.high %v2715, %v2747
        %v2761 = vcombine.low %v2722, %v2754
        %v2762 = vcombine.high %v2722, %v2754
        %v2763 = vcombine.low %v1737, %v1753
        %v2764 = vcombine.high %v1737, %v1753
        %v2766 = vunpack.c.l.s4 1983009808
        %v2767 = vunpack.c.0.s8 %v2766
        %v2768 = vlaneseq
        %v2769 = vshrl.u32 %v2768, 7
        %v2770 = vsub.s32 %v2767, %v2769
        %v2771 = vrot.slane %v2763, %v2770
        %v2773 = vunpack.c.l.s4 1983009808
        %v2774 = vunpack.c.0.s8 %v2773
        %v2775 = vlaneseq
        %v2776 = vshrl.u32 %v2775, 7
        %v2777 = vsub.s32 %v2774, %v2776
        %v2778 = vrot.slane %v2764, %v2777
        %v2779 = vcombine.low %v1745, %v1761
        %v2780 = vcombine.high %v1745, %v1761
        %v2782 = vunpack.c.l.s4 1983009808
        %v2783 = vunpack.c.0.s8 %v2782
        %v2784 = vlaneseq
        %v2785 = vshrl.u32 %v2784, 7
        %v2786 = vsub.s32 %v2783, %v2785
        %v2787 = vrot.slane %v2779, %v2786
        %v2789 = vunpack.c.l.s4 1983009808
        %v2790 = vunpack.c.0.s8 %v2789
        %v2791 = vlaneseq
        %v2792 = vshrl.u32 %v2791, 7
        %v2793 = vsub.s32 %v2790, %v2792
        %v2794 = vrot.slane %v2780, %v2793
        %v2795 = vcombine.low %v1769, %v1785
        %v2796 = vcombine.high %v1769, %v1785
        %v2798 = vunpack.c.l.s4 1983009808
        %v2799 = vunpack.c.0.s8 %v2798
        %v2800 = vlaneseq
        %v2801 = vshrl.u32 %v2800, 7
        %v2802 = vsub.s32 %v2799, %v2801
        %v2803 = vrot.slane %v2795, %v2802
        %v2805 = vunpack.c.l.s4 1983009808
        %v2806 = vunpack.c.0.s8 %v2805
        %v2807 = vlaneseq
        %v2808 = vshrl.u32 %v2807, 7
        %v2809 = vsub.s32 %v2806, %v2808
        %v2810 = vrot.slane %v2796, %v2809
        %v2811 = vcombine.low %v1777, %v1793
        %v2812 = vcombine.high %v1777, %v1793
        %v2814 = vunpack.c.l.s4 1983009808
        %v2815 = vunpack.c.0.s8 %v2814
        %v2816 = vlaneseq
        %v2817 = vshrl.u32 %v2816, 7
        %v2818 = vsub.s32 %v2815, %v2817
        %v2819 = vrot.slane %v2811, %v2818
        %v2821 = vunpack.c.l.s4 1983009808
        %v2822 = vunpack.c.0.s8 %v2821
        %v2823 = vlaneseq
        %v2824 = vshrl.u32 %v2823, 7
        %v2825 = vsub.s32 %v2822, %v2824
        %v2826 = vrot.slane %v2812, %v2825
        %v2827 = vcombine.low %v2771, %v2787
        %v2828 = vcombine.high %v2771, %v2787
        %v2830 = vunpack.c.l.s4 1934713408
        %v2831 = vunpack.c.0.s8 %v2830
        %v2832 = vlaneseq
        %v2833 = vshrl.u32 %v2832, 7
        %v2834 = vsub.s32 %v2831, %v2833
        %v2835 = vrot.slane %v2827, %v2834
        %v2837 = vunpack.c.l.s4 1934713408
        %v2838 = vunpack.c.0.s8 %v2837
        %v2839 = vlaneseq
        %v2840 = vshrl.u32 %v2839, 7
        %v2841 = vsub.s32 %v2838, %v2840
        %v2842 = vrot.slane %v2828, %v2841
        %v2843 = vcombine.low %v2778, %v2794
        %v2844 = vcombine.high %v2778, %v2794
        %v2846 = vunpack.c.l.s4 1934713408
        %v2847 = vunpack.c.0.s8 %v2846
        %v2848 = vlaneseq
        %v2849 = vshrl.u32 %v2848, 7
        %v2850 = vsub.s32 %v2847, %v2849
        %v2851 = vrot.slane %v2843, %v2850
        %v2853 = vunpack.c.l.s4 1934713408
        %v2854 = vunpack.c.0.s8 %v2853
        %v2855 = vlaneseq
        %v2856 = vshrl.u32 %v2855, 7
        %v2857 = vsub.s32 %v2854, %v2856
        %v2858 = vrot.slane %v2844, %v2857
        %v2859 = vcombine.low %v2803, %v2819
        %v2860 = vcombine.high %v2803, %v2819
        %v2862 = vunpack.c.l.s4 1934713408
        %v2863 = vunpack.c.0.s8 %v2862
        %v2864 = vlaneseq
        %v2865 = vshrl.u32 %v2864, 7
        %v2866 = vsub.s32 %v2863, %v2865
        %v2867 = vrot.slane %v2859, %v2866
        %v2869 = vunpack.c.l.s4 1934713408
        %v2870 = vunpack.c.0.s8 %v2869
        %v2871 = vlaneseq
        %v2872 = vshrl.u32 %v2871, 7
        %v2873 = vsub.s32 %v2870, %v2872
        %v2874 = vrot.slane %v2860, %v2873
        %v2875 = vcombine.low %v2810, %v2826
        %v2876 = vcombine.high %v2810, %v2826
        %v2878 = vunpack.c.l.s4 1934713408
        %v2879 = vunpack.c.0.s8 %v2878
        %v2880 = vlaneseq
        %v2881 = vshrl.u32 %v2880, 7
        %v2882 = vsub.s32 %v2879, %v2881
        %v2883 = vrot.slane %v2875, %v2882
        %v2885 = vunpack.c.l.s4 1934713408
        %v2886 = vunpack.c.0.s8 %v2885
        %v2887 = vlaneseq
        %v2888 = vshrl.u32 %v2887, 7
        %v2889 = vsub.s32 %v2886, %v2888
        %v2890 = vrot.slane %v2876, %v2889
        %v2891 = vcombine.low %v2835, %v2867
        %v2892 = vcombine.high %v2835, %v2867
        %v2893 = vcombine.low %v2842, %v2874
        %v2894 = vcombine.high %v2842, %v2874
        %v2895 = vcombine.low %v2851, %v2883
        %v2896 = vcombine.high %v2851, %v2883
        %v2897 = vcombine.low %v2858, %v2890
        %v2898 = vcombine.high %v2858, %v2890
        %v2899 = vcombine.low %v1741, %v1757
        %v2900 = vcombine.high %v1741, %v1757
        %v2902 = vunpack.c.l.s4 1983009808
        %v2903 = vunpack.c.0.s8 %v2902
        %v2904 = vlaneseq
        %v2905 = vshrl.u32 %v2904, 7
        %v2906 = vsub.s32 %v2903, %v2905
        %v2907 = vrot.slane %v2899, %v2906
        %v2909 = vunpack.c.l.s4 1983009808
        %v2910 = vunpack.c.0.s8 %v2909
        %v2911 = vlaneseq
        %v2912 = vshrl.u32 %v2911, 7
        %v2913 = vsub.s32 %v2910, %v2912
        %v2914 = vrot.slane %v2900, %v2913
        %v2915 = vcombine.low %v1749, %v1765
        %v2916 = vcombine.high %v1749, %v1765
        %v2918 = vunpack.c.l.s4 1983009808
        %v2919 = vunpack.c.0.s8 %v2918
        %v2920 = vlaneseq
        %v2921 = vshrl.u32 %v2920, 7
        %v2922 = vsub.s32 %v2919, %v2921
        %v2923 = vrot.slane %v2915, %v2922
        %v2925 = vunpack.c.l.s4 1983009808
        %v2926 = vunpack.c.0.s8 %v2925
        %v2927 = vlaneseq
        %v2928 = vshrl.u32 %v2927, 7
        %v2929 = vsub.s32 %v2926, %v2928
        %v2930 = vrot.slane %v2916, %v2929
        %v2931 = vcombine.low %v1773, %v1789
        %v2932 = vcombine.high %v1773, %v1789
        %v2934 = vunpack.c.l.s4 1983009808
        %v2935 = vunpack.c.0.s8 %v2934
        %v2936 = vlaneseq
        %v2937 = vshrl.u32 %v2936, 7
        %v2938 = vsub.s32 %v2935, %v2937
        %v2939 = vrot.slane %v2931, %v2938
        %v2941 = vunpack.c.l.s4 1983009808
        %v2942 = vunpack.c.0.s8 %v2941
        %v2943 = vlaneseq
        %v2944 = vshrl.u32 %v2943, 7
        %v2945 = vsub.s32 %v2942, %v2944
        %v2946 = vrot.slane %v2932, %v2945
        %v2947 = vcombine.low %v1781, %v1797
        %v2948 = vcombine.high %v1781, %v1797
        %v2950 = vunpack.c.l.s4 1983009808
        %v2951 = vunpack.c.0.s8 %v2950
        %v2952 = vlaneseq
        %v2953 = vshrl.u32 %v2952, 7
        %v2954 = vsub.s32 %v2951, %v2953
        %v2955 = vrot.slane %v2947, %v2954
        %v2957 = vunpack.c.l.s4 1983009808
        %v2958 = vunpack.c.0.s8 %v2957
        %v2959 = vlaneseq
        %v2960 = vshrl.u32 %v2959, 7
        %v2961 = vsub.s32 %v2958, %v2960
        %v2962 = vrot.slane %v2948, %v2961
        %v2963 = vcombine.low %v2907, %v2923
        %v2964 = vcombine.high %v2907, %v2923
        %v2966 = vunpack.c.l.s4 1934713408
        %v2967 = vunpack.c.0.s8 %v2966
        %v2968 = vlaneseq
        %v2969 = vshrl.u32 %v2968, 7
        %v2970 = vsub.s32 %v2967, %v2969
        %v2971 = vrot.slane %v2963, %v2970
        %v2973 = vunpack.c.l.s4 1934713408
        %v2974 = vunpack.c.0.s8 %v2973
        %v2975 = vlaneseq
        %v2976 = vshrl.u32 %v2975, 7
        %v2977 = vsub.s32 %v2974, %v2976
        %v2978 = vrot.slane %v2964, %v2977
        %v2979 = vcombine.low %v2914, %v2930
        %v2980 = vcombine.high %v2914, %v2930
        %v2982 = vunpack.c.l.s4 1934713408
        %v2983 = vunpack.c.0.s8 %v2982
        %v2984 = vlaneseq
        %v2985 = vshrl.u32 %v2984, 7
        %v2986 = vsub.s32 %v2983, %v2985
        %v2987 = vrot.slane %v2979, %v2986
        %v2989 = vunpack.c.l.s4 1934713408
        %v2990 = vunpack.c.0.s8 %v2989
        %v2991 = vlaneseq
        %v2992 = vshrl.u32 %v2991, 7
        %v2993 = vsub.s32 %v2990, %v2992
        %v2994 = vrot.slane %v2980, %v2993
        %v2995 = vcombine.low %v2939, %v2955
        %v2996 = vcombine.high %v2939, %v2955
        %v2998 = vunpack.c.l.s4 1934713408
        %v2999 = vunpack.c.0.s8 %v2998
        %v3000 = vlaneseq
        %v3001 = vshrl.u32 %v3000, 7
        %v3002 = vsub.s32 %v2999, %v3001
        %v3003 = vrot.slane %v2995, %v3002
        %v3005 = vunpack.c.l.s4 1934713408
        %v3006 = vunpack.c.0.s8 %v3005
        %v3007 = vlaneseq
        %v3008 = vshrl.u32 %v3007, 7
        %v3009 = vsub.s32 %v3006, %v3008
        %v3010 = vrot.slane %v2996, %v3009
        %v3011 = vcombine.low %v2946, %v2962
        %v3012 = vcombine.high %v2946, %v2962
        %v3014 = vunpack.c.l.s4 1934713408
        %v3015 = vunpack.c.0.s8 %v3014
        %v3016 = vlaneseq
        %v3017 = vshrl.u32 %v3016, 7
        %v3018 = vsub.s32 %v3015, %v3017
        %v3019 = vrot.slane %v3011, %v3018
        %v3021 = vunpack.c.l.s4 1934713408
        %v3022 = vunpack.c.0.s8 %v3021
        %v3023 = vlaneseq
        %v3024 = vshrl.u32 %v3023, 7
        %v3025 = vsub.s32 %v3022, %v3024
        %v3026 = vrot.slane %v3012, %v3025
        %v3027 = vcombine.low %v2971, %v3003
        %v3028 = vcombine.high %v2971, %v3003
        %v3029 = vcombine.low %v2978, %v3010
        %v3030 = vcombine.high %v2978, %v3010
        %v3031 = vcombine.low %v2987, %v3019
        %v3032 = vcombine.high %v2987, %v3019
        %v3033 = vcombine.low %v2994, %v3026
        %v3034 = vcombine.high %v2994, %v3026
        %v3035 = vcombine.high %v1801, %v1674
        %v3037 = vunpack.c.l.s4 1983009808
        %v3038 = vunpack.c.0.s8 %v3037
        %v3039 = vlaneseq
        %v3040 = vshrl.u32 %v3039, 7
        %v3041 = vsub.s32 %v3038, %v3040
        %v3042 = vrot.slane %v1801, %v3041
        %v3044 = vunpack.c.l.s4 1983009808
        %v3045 = vunpack.c.0.s8 %v3044
        %v3046 = vlaneseq
        %v3047 = vshrl.u32 %v3046, 7
        %v3048 = vsub.s32 %v3045, %v3047
        %v3049 = vrot.slane %v3035, %v3048
        %v3050 = vcombine.high %v1809, %v1674
        %v3052 = vunpack.c.l.s4 1983009808
        %v3053 = vunpack.c.0.s8 %v3052
        %v3054 = vlaneseq
        %v3055 = vshrl.u32 %v3054, 7
        %v3056 = vsub.s32 %v3053, %v3055
        %v3057 = vrot.slane %v1809, %v3056
        %v3059 = vunpack.c.l.s4 1983009808
        %v3060 = vunpack.c.0.s8 %v3059
        %v3061 = vlaneseq
        %v3062 = vshrl.u32 %v3061, 7
        %v3063 = vsub.s32 %v3060, %v3062
        %v3064 = vrot.slane %v3050, %v3063
        %v3065 = vcombine.low %v3042, %v3057
        %v3066 = vcombine.high %v3042, %v3057
        %v3068 = vunpack.c.l.s4 1934713408
        %v3069 = vunpack.c.0.s8 %v3068
        %v3070 = vlaneseq
        %v3071 = vshrl.u32 %v3070, 7
        %v3072 = vsub.s32 %v3069, %v3071
        %v3073 = vrot.slane %v3065, %v3072
        %v3075 = vunpack.c.l.s4 1934713408
        %v3076 = vunpack.c.0.s8 %v3075
        %v3077 = vlaneseq
        %v3078 = vshrl.u32 %v3077, 7
        %v3079 = vsub.s32 %v3076, %v3078
        %v3080 = vrot.slane %v3066, %v3079
        %v3081 = vcombine.low %v3049, %v3064
        %v3082 = vcombine.high %v3049, %v3064
        %v3084 = vunpack.c.l.s4 1934713408
        %v3085 = vunpack.c.0.s8 %v3084
        %v3086 = vlaneseq
        %v3087 = vshrl.u32 %v3086, 7
        %v3088 = vsub.s32 %v3085, %v3087
        %v3089 = vrot.slane %v3081, %v3088
        %v3091 = vunpack.c.l.s4 1934713408
        %v3092 = vunpack.c.0.s8 %v3091
        %v3093 = vlaneseq
        %v3094 = vshrl.u32 %v3093, 7
        %v3095 = vsub.s32 %v3092, %v3094
        %v3096 = vrot.slane %v3082, %v3095
        %v3097 = vcombine.high %v3073, 0
        %v3098 = vcombine.high %v3080, 0
        %v3099 = vcombine.high %v3089, 0
        %v3100 = vcombine.high %v3096, 0
        %v3101 = vcombine.high %v1805, %v1677
        %v3103 = vunpack.c.l.s4 1983009808
        %v3104 = vunpack.c.0.s8 %v3103
        %v3105 = vlaneseq
        %v3106 = vshrl.u32 %v3105, 7
        %v3107 = vsub.s32 %v3104, %v3106
        %v3108 = vrot.slane %v1805, %v3107
        %v3110 = vunpack.c.l.s4 1983009808
        %v3111 = vunpack.c.0.s8 %v3110
        %v3112 = vlaneseq
        %v3113 = vshrl.u32 %v3112, 7
        %v3114 = vsub.s32 %v3111, %v3113
        %v3115 = vrot.slane %v3101, %v3114
        %v3116 = vcombine.high %v1813, %v1677
        %v3118 = vunpack.c.l.s4 1983009808
        %v3119 = vunpack.c.0.s8 %v3118
        %v3120 = vlaneseq
        %v3121 = vshrl.u32 %v3120, 7
        %v3122 = vsub.s32 %v3119, %v3121
        %v3123 = vrot.slane %v1813, %v3122
        %v3125 = vunpack.c.l.s4 1983009808
        %v3126 = vunpack.c.0.s8 %v3125
        %v3127 = vlaneseq
        %v3128 = vshrl.u32 %v3127, 7
        %v3129 = vsub.s32 %v3126, %v3128
        %v3130 = vrot.slane %v3116, %v3129
        %v3131 = vcombine.low %v3108, %v3123
        %v3132 = vcombine.high %v3108, %v3123
        %v3134 = vunpack.c.l.s4 1934713408
        %v3135 = vunpack.c.0.s8 %v3134
        %v3136 = vlaneseq
        %v3137 = vshrl.u32 %v3136, 7
        %v3138 = vsub.s32 %v3135, %v3137
        %v3139 = vrot.slane %v3131, %v3138
        %v3141 = vunpack.c.l.s4 1934713408
        %v3142 = vunpack.c.0.s8 %v3141
        %v3143 = vlaneseq
        %v3144 = vshrl.u32 %v3143, 7
        %v3145 = vsub.s32 %v3142, %v3144
        %v3146 = vrot.slane %v3132, %v3145
        %v3147 = vcombine.low %v3115, %v3130
        %v3148 = vcombine.high %v3115, %v3130
        %v3150 = vunpack.c.l.s4 1934713408
        %v3151 = vunpack.c.0.s8 %v3150
        %v3152 = vlaneseq
        %v3153 = vshrl.u32 %v3152, 7
        %v3154 = vsub.s32 %v3151, %v3153
        %v3155 = vrot.slane %v3147, %v3154
        %v3157 = vunpack.c.l.s4 1934713408
        %v3158 = vunpack.c.0.s8 %v3157
        %v3159 = vlaneseq
        %v3160 = vshrl.u32 %v3159, 7
        %v3161 = vsub.s32 %v3158, %v3160
        %v3162 = vrot.slane %v3148, %v3161
        %v3163 = vcombine.high %v3139, 0
        %v3164 = vcombine.high %v3146, 0
        %v3165 = vcombine.high %v3155, 0
        %v3166 = vcombine.high %v3162, 0
        %3170 = vrot.lane.b32.xlu0 %v2079, 32
        %v3171 = vpop.permute.xlu0 %3170
        %3172 = vrot.lane.b32.xlu0 %v2351, 32
        %v3173 = vpop.permute.xlu0 %3172
        %3174 = vrot.lane.b32.xlu0 %v2463, 32
        %v3175 = vpop.permute.xlu0 %3174
        %3179 = vrot.lane.b32.xlu0 %v1944, 64
        %v3180 = vpop.permute.xlu0 %3179
        %3181 = vrot.lane.b32.xlu0 %v2216, 64
        %v3182 = vpop.permute.xlu0 %3181
        %3183 = vrot.lane.b32.xlu0 %v2421, 64
        %v3184 = vpop.permute.xlu0 %3183
        %3188 = vrot.lane.b32.xlu0 %v2080, 96
        %v3189 = vpop.permute.xlu0 %3188
        %3190 = vrot.lane.b32.xlu0 %v2352, 96
        %v3191 = vpop.permute.xlu0 %3190
        %3192 = vrot.lane.b32.xlu0 %v2487, 96
        %v3193 = vpop.permute.xlu0 %3192
        %3197 = vrot.lane.b32.xlu0 %v2081, 32
        %v3198 = vpop.permute.xlu0 %3197
        %3199 = vrot.lane.b32.xlu0 %v2353, 32
        %v3200 = vpop.permute.xlu0 %3199
        %3201 = vrot.lane.b32.xlu0 %v2470, 32
        %v3202 = vpop.permute.xlu0 %3201
        %3206 = vrot.lane.b32.xlu0 %v1946, 64
        %v3207 = vpop.permute.xlu0 %3206
        %3208 = vrot.lane.b32.xlu0 %v2218, 64
        %v3209 = vpop.permute.xlu0 %3208
        %3210 = vrot.lane.b32.xlu0 %v2422, 64
        %v3211 = vpop.permute.xlu0 %3210
        %3215 = vrot.lane.b32.xlu0 %v2082, 96
        %v3216 = vpop.permute.xlu0 %3215
        %3217 = vrot.lane.b32.xlu0 %v2354, 96
        %v3218 = vpop.permute.xlu0 %3217
        %3219 = vrot.lane.b32.xlu0 %v2488, 96
        %v3220 = vpop.permute.xlu0 %3219
        %3224 = vrot.lane.b32.xlu0 %v2083, 32
        %v3225 = vpop.permute.xlu0 %3224
        %3226 = vrot.lane.b32.xlu0 %v2355, 32
        %v3227 = vpop.permute.xlu0 %3226
        %3228 = vrot.lane.b32.xlu0 %v2479, 32
        %v3229 = vpop.permute.xlu0 %3228
        %3233 = vrot.lane.b32.xlu0 %v1948, 64
        %v3234 = vpop.permute.xlu0 %3233
        %3235 = vrot.lane.b32.xlu0 %v2220, 64
        %v3236 = vpop.permute.xlu0 %3235
        %3237 = vrot.lane.b32.xlu0 %v2423, 64
        %v3238 = vpop.permute.xlu0 %3237
        %3242 = vrot.lane.b32.xlu0 %v2084, 96
        %v3243 = vpop.permute.xlu0 %3242
        %3244 = vrot.lane.b32.xlu0 %v2356, 96
        %v3245 = vpop.permute.xlu0 %3244
        %3246 = vrot.lane.b32.xlu0 %v2489, 96
        %v3247 = vpop.permute.xlu0 %3246
        %3251 = vrot.lane.b32.xlu0 %v2085, 32
        %v3252 = vpop.permute.xlu0 %3251
        %3253 = vrot.lane.b32.xlu0 %v2357, 32
        %v3254 = vpop.permute.xlu0 %3253
        %3255 = vrot.lane.b32.xlu0 %v2486, 32
        %v3256 = vpop.permute.xlu0 %3255
        %3260 = vrot.lane.b32.xlu0 %v1950, 64
        %v3261 = vpop.permute.xlu0 %3260
        %3262 = vrot.lane.b32.xlu0 %v2222, 64
        %v3263 = vpop.permute.xlu0 %3262
        %3264 = vrot.lane.b32.xlu0 %v2424, 64
        %v3265 = vpop.permute.xlu0 %3264
        %3269 = vrot.lane.b32.xlu0 %v2086, 96
        %v3270 = vpop.permute.xlu0 %3269
        %3271 = vrot.lane.b32.xlu0 %v2358, 96
        %v3272 = vpop.permute.xlu0 %3271
        %3273 = vrot.lane.b32.xlu0 %v2490, 96
        %v3274 = vpop.permute.xlu0 %3273
        %3278 = vrot.lane.b32.xlu0 %v2755, 32
        %v3279 = vpop.permute.xlu0 %3278
        %3280 = vrot.lane.b32.xlu0 %v3027, 32
        %v3281 = vpop.permute.xlu0 %3280
        %3282 = vrot.lane.b32.xlu0 %v3139, 32
        %v3283 = vpop.permute.xlu0 %3282
        %3287 = vrot.lane.b32.xlu0 %v2620, 64
        %v3288 = vpop.permute.xlu0 %3287
        %3289 = vrot.lane.b32.xlu0 %v2892, 64
        %v3290 = vpop.permute.xlu0 %3289
        %3291 = vrot.lane.b32.xlu0 %v3097, 64
        %v3292 = vpop.permute.xlu0 %3291
        %3296 = vrot.lane.b32.xlu0 %v2756, 96
        %v3297 = vpop.permute.xlu0 %3296
        %3298 = vrot.lane.b32.xlu0 %v3028, 96
        %v3299 = vpop.permute.xlu0 %3298
        %3300 = vrot.lane.b32.xlu0 %v3163, 96
        %v3301 = vpop.permute.xlu0 %3300
        %3305 = vrot.lane.b32.xlu0 %v2757, 32
        %v3306 = vpop.permute.xlu0 %3305
        %3307 = vrot.lane.b32.xlu0 %v3029, 32
        %v3308 = vpop.permute.xlu0 %3307
        %3309 = vrot.lane.b32.xlu0 %v3146, 32
        %v3310 = vpop.permute.xlu0 %3309
        %3314 = vrot.lane.b32.xlu0 %v2622, 64
        %v3315 = vpop.permute.xlu0 %3314
        %3316 = vrot.lane.b32.xlu0 %v2894, 64
        %v3317 = vpop.permute.xlu0 %3316
        %3318 = vrot.lane.b32.xlu0 %v3098, 64
        %v3319 = vpop.permute.xlu0 %3318
        %3323 = vrot.lane.b32.xlu0 %v2758, 96
        %v3324 = vpop.permute.xlu0 %3323
        %3325 = vrot.lane.b32.xlu0 %v3030, 96
        %v3326 = vpop.permute.xlu0 %3325
        %3327 = vrot.lane.b32.xlu0 %v3164, 96
        %v3328 = vpop.permute.xlu0 %3327
        %3332 = vrot.lane.b32.xlu0 %v2759, 32
        %v3333 = vpop.permute.xlu0 %3332
        %3334 = vrot.lane.b32.xlu0 %v3031, 32
        %v3335 = vpop.permute.xlu0 %3334
        %3336 = vrot.lane.b32.xlu0 %v3155, 32
        %v3337 = vpop.permute.xlu0 %3336
        %3341 = vrot.lane.b32.xlu0 %v2624, 64
        %v3342 = vpop.permute.xlu0 %3341
        %3343 = vrot.lane.b32.xlu0 %v2896, 64
        %v3344 = vpop.permute.xlu0 %3343
        %3345 = vrot.lane.b32.xlu0 %v3099, 64
        %v3346 = vpop.permute.xlu0 %3345
        %3350 = vrot.lane.b32.xlu0 %v2760, 96
        %v3351 = vpop.permute.xlu0 %3350
        %3352 = vrot.lane.b32.xlu0 %v3032, 96
        %v3353 = vpop.permute.xlu0 %3352
        %3354 = vrot.lane.b32.xlu0 %v3165, 96
        %v3355 = vpop.permute.xlu0 %3354
        %3359 = vrot.lane.b32.xlu0 %v2761, 32
        %v3360 = vpop.permute.xlu0 %3359
        %3361 = vrot.lane.b32.xlu0 %v3033, 32
        %v3362 = vpop.permute.xlu0 %3361
        %3363 = vrot.lane.b32.xlu0 %v3162, 32
        %v3364 = vpop.permute.xlu0 %3363
        %3368 = vrot.lane.b32.xlu0 %v2626, 64
        %v3369 = vpop.permute.xlu0 %3368
        %3370 = vrot.lane.b32.xlu0 %v2898, 64
        %v3371 = vpop.permute.xlu0 %3370
        %3372 = vrot.lane.b32.xlu0 %v3100, 64
        %v3373 = vpop.permute.xlu0 %3372
        %3377 = vrot.lane.b32.xlu0 %v2762, 96
        %v3378 = vpop.permute.xlu0 %3377
        %3379 = vrot.lane.b32.xlu0 %v3034, 96
        %v3380 = vpop.permute.xlu0 %3379
        %3381 = vrot.lane.b32.xlu0 %v3166, 96
        %v3382 = vpop.permute.xlu0 %3381
        %vm3383 = vcmask 261120
        %v3386 = vsel %vm3383, %v1943, %v3171
        %v3389 = vsel %vm3383, %v2215, %v3173
        %v3392 = vsel %vm3383, %v2397, %v3175
        %vm3393 = vcmask 523264
        %v3395 = vsel %vm3393, %v3386, %v3180
        %v3397 = vsel %vm3393, %v3389, %v3182
        %v3399 = vsel %vm3393, %v3392, %v3184
        %vm3400 = vcmask 785408
        %v3402 = vsel %vm3400, %v3395, %v3189
        %v3405 = vsel %vm3400, %v3397, %v3191
        %v3408 = vsel %vm3400, %v3399, %v3193
        %v3411 = vsel %vm3383, %v1945, %v3198
        %v3414 = vsel %vm3383, %v2217, %v3200
        %v3417 = vsel %vm3383, %v2404, %v3202
        %v3419 = vsel %vm3393, %v3411, %v3207
        %v3421 = vsel %vm3393, %v3414, %v3209
        %v3423 = vsel %vm3393, %v3417, %v3211
        %v3425 = vsel %vm3400, %v3419, %v3216
        %v3428 = vsel %vm3400, %v3421, %v3218
        %v3431 = vsel %vm3400, %v3423, %v3220
        %v3434 = vsel %vm3383, %v1947, %v3225
        %v3437 = vsel %vm3383, %v2219, %v3227
        %v3440 = vsel %vm3383, %v2413, %v3229
        %v3442 = vsel %vm3393, %v3434, %v3234
        %v3444 = vsel %vm3393, %v3437, %v3236
        %v3446 = vsel %vm3393, %v3440, %v3238
        %v3448 = vsel %vm3400, %v3442, %v3243
        %v3451 = vsel %vm3400, %v3444, %v3245
        %v3454 = vsel %vm3400, %v3446, %v3247
        %v3457 = vsel %vm3383, %v1949, %v3252
        %v3460 = vsel %vm3383, %v2221, %v3254
        %v3463 = vsel %vm3383, %v2420, %v3256
        %v3465 = vsel %vm3393, %v3457, %v3261
        %v3467 = vsel %vm3393, %v3460, %v3263
        %v3469 = vsel %vm3393, %v3463, %v3265
        %v3471 = vsel %vm3400, %v3465, %v3270
        %v3474 = vsel %vm3400, %v3467, %v3272
        %v3477 = vsel %vm3400, %v3469, %v3274
        %v3480 = vsel %vm3383, %v2619, %v3279
        %v3483 = vsel %vm3383, %v2891, %v3281
        %v3486 = vsel %vm3383, %v3073, %v3283
        %v3488 = vsel %vm3393, %v3480, %v3288
        %v3490 = vsel %vm3393, %v3483, %v3290
        %v3492 = vsel %vm3393, %v3486, %v3292
        %v3494 = vsel %vm3400, %v3488, %v3297
        %v3497 = vsel %vm3400, %v3490, %v3299
        %v3500 = vsel %vm3400, %v3492, %v3301
        %v3503 = vsel %vm3383, %v2621, %v3306
        %v3506 = vsel %vm3383, %v2893, %v3308
        %v3509 = vsel %vm3383, %v3080, %v3310
        %v3511 = vsel %vm3393, %v3503, %v3315
        %v3513 = vsel %vm3393, %v3506, %v3317
        %v3515 = vsel %vm3393, %v3509, %v3319
        %v3517 = vsel %vm3400, %v3511, %v3324
        %v3520 = vsel %vm3400, %v3513, %v3326
        %v3523 = vsel %vm3400, %v3515, %v3328
        %v3526 = vsel %vm3383, %v2623, %v3333
        %v3529 = vsel %vm3383, %v2895, %v3335
        %v3532 = vsel %vm3383, %v3089, %v3337
        %v3534 = vsel %vm3393, %v3526, %v3342
        %v3536 = vsel %vm3393, %v3529, %v3344
        %v3538 = vsel %vm3393, %v3532, %v3346
        %v3540 = vsel %vm3400, %v3534, %v3351
        %v3543 = vsel %vm3400, %v3536, %v3353
        %v3546 = vsel %vm3400, %v3538, %v3355
        %v3549 = vsel %vm3383, %v2625, %v3360
        %v3552 = vsel %vm3383, %v2897, %v3362
        %v3555 = vsel %vm3383, %v3096, %v3364
        %v3557 = vsel %vm3393, %v3549, %v3369
        %v3559 = vsel %vm3393, %v3552, %v3371
        %v3561 = vsel %vm3393, %v3555, %v3373
        %v3563 = vsel %vm3400, %v3557, %v3378
        %v3566 = vsel %vm3400, %v3559, %v3380
        %v3569 = vsel %vm3400, %v3561, %v3382
        %v3570 = vld [vmem:[%s3] sm:$0xf]
        %v3571 = vld [vmem:[%s4] sm:$0xff]
        %3573 = vset.pattern.permute.xlu0 0
        %3574 = vperm.xlu0 %3573, %v3571
        %v3575 = vpop.permute.xlu0 %3574
        %vm3577 = vcmask 293888
        %v3579 = vsel %vm3577, %v3570, 0
        %vm3581 = vcmask 1041408
        %v3582 = vsel %vm3581, %v3408, 0
        %v3584 = vsel %vm3581, %v3431, 0
        %v3586 = vsel %vm3581, %v3454, 0
        %v3588 = vsel %vm3581, %v3477, 0
        %v3590 = vsel %vm3581, %v3500, 0
        %v3592 = vsel %vm3581, %v3523, 0
        %v3594 = vsel %vm3581, %v3546, 0
        %v3596 = vsel %vm3581, %v3569, 0
        %3598 = vmatprep.subr.bf16.mxu0 %v3425
        %3599 = vmatpush1.bf16.msra.mxu0 %v3402
        %3600 = vmatprep.subr.bf16.mxu0 %v3428
        %3601 = vmatpush1.bf16.msra.mxu0 %v3405
        %3602 = vmatprep.subr.bf16.mxu0 %v3584
        %3603 = vmatpush1.bf16.msra.mxu0 %v3582
        %3604 = vmatprep.subr.bf16.mxu0 0
        %3605 = vmatpush1.bf16.msra.mxu0 0
        %3606 = vmatprep.subr.bf16.mxu0 0
        %3607 = vmatpush1.bf16.msra.mxu0 0
        %3608 = vmatprep.subr.bf16.mxu0 0
        %3609 = vmatpush1.bf16.msra.mxu0 0
        %3610 = vmatprep.subr.bf16.mxu0 0
        %3611 = vmatpush1.bf16.msra.mxu0 0
        %3612 = vmatprep.subr.bf16.mxu0 0
        %3613 = vmatpush1.bf16.msra.mxu0 0
        %3614 = vmatprep.subr.bf16.mxu0 0
        %3615 = vmatpush1.bf16.msra.mxu0 0
        %3616 = vmatprep.subr.bf16.mxu0 0
        %3617 = vmatpush1.bf16.msra.mxu0 0
        %3618 = vmatprep.subr.bf16.mxu0 0
        %3619 = vmatpush1.bf16.msra.mxu0 0
        %3620 = vmatprep.subr.bf16.mxu0 0
        %3621 = vmatpush1.bf16.msra.mxu0 0
        %3622 = vmatprep.subr.bf16.mxu0 0
        %3623 = vmatpush1.bf16.msra.mxu0 0
        %3624 = vmatprep.subr.bf16.mxu0 0
        %3625 = vmatpush1.bf16.msra.mxu0 0
        %3626 = vmatprep.subr.bf16.mxu0 0
        %3627 = vmatpush1.bf16.msra.mxu0 0
        %3628 = vmatprep.subr.bf16.mxu0 0
        %3629 = vmatpush1.bf16.msra.mxu0 0
        %3630 = vmatprep.mubr.bf16.mxu0 0
        %3631 = vmatmul.mubr.bf16.gmra.mrb[0].mxu0 %v3579
        %v3632 = vpop.f32.mrb[0].mxu0
        %v3633 = vadd.f32 %v3575, %v3632
        %v3634 = vpop.f32.mrb[0].mxu0
        %v3635 = vadd.f32 %v3575, %v3634
        %v3636 = vpop.f32.mrb[0].mxu0
        %v3637 = vpop.f32.mrb[0].mxu0
        %3638 = vdwg.mxu0
        %3639 = vmatprep.subr.bf16.mxu0 %v3471
        %3640 = vmatpush1.bf16.msra.mxu0 %v3448
        %3641 = vmatprep.subr.bf16.mxu0 %v3474
        %3642 = vmatpush1.bf16.msra.mxu0 %v3451
        %3643 = vmatprep.subr.bf16.mxu0 %v3588
        %3644 = vmatpush1.bf16.msra.mxu0 %v3586
        %3645 = vmatprep.subr.bf16.mxu0 0
        %3646 = vmatpush1.bf16.msra.mxu0 0
        %3647 = vmatprep.subr.bf16.mxu0 0
        %3648 = vmatpush1.bf16.msra.mxu0 0
        %3649 = vmatprep.subr.bf16.mxu0 0
        %3650 = vmatpush1.bf16.msra.mxu0 0
        %3651 = vmatprep.subr.bf16.mxu0 0
        %3652 = vmatpush1.bf16.msra.mxu0 0
        %3653 = vmatprep.subr.bf16.mxu0 0
        %3654 = vmatpush1.bf16.msra.mxu0 0
        %3655 = vmatprep.subr.bf16.mxu0 0
        %3656 = vmatpush1.bf16.msra.mxu0 0
        %3657 = vmatprep.subr.bf16.mxu0 0
        %3658 = vmatpush1.bf16.msra.mxu0 0
        %3659 = vmatprep.subr.bf16.mxu0 0
        %3660 = vmatpush1.bf16.msra.mxu0 0
        %3661 = vmatprep.subr.bf16.mxu0 0
        %3662 = vmatpush1.bf16.msra.mxu0 0
        %3663 = vmatprep.subr.bf16.mxu0 0
        %3664 = vmatpush1.bf16.msra.mxu0 0
        %3665 = vmatprep.subr.bf16.mxu0 0
        %3666 = vmatpush1.bf16.msra.mxu0 0
        %3667 = vmatprep.subr.bf16.mxu0 0
        %3668 = vmatpush1.bf16.msra.mxu0 0
        %3669 = vmatprep.subr.bf16.mxu0 0
        %3670 = vmatpush1.bf16.msra.mxu0 0
        %3671 = vmatprep.mubr.bf16.mxu0 0
        %3672 = vmatmul.mubr.bf16.gmra.mrb[0].mxu0 %v3579
        %v3673 = vpop.f32.mrb[0].mxu0
        %v3674 = vadd.f32 %v3575, %v3673
        %v3675 = vpop.f32.mrb[0].mxu0
        %v3676 = vadd.f32 %v3575, %v3675
        %v3677 = vpop.f32.mrb[0].mxu0
        %v3678 = vpop.f32.mrb[0].mxu0
        %3679 = vdwg.mxu0
        %3680 = vmatprep.subr.bf16.mxu0 %v3517
        %3681 = vmatpush1.bf16.msra.mxu0 %v3494
        %3682 = vmatprep.subr.bf16.mxu0 %v3520
        %3683 = vmatpush1.bf16.msra.mxu0 %v3497
        %3684 = vmatprep.subr.bf16.mxu0 %v3592
        %3685 = vmatpush1.bf16.msra.mxu0 %v3590
        %3686 = vmatprep.subr.bf16.mxu0 0
        %3687 = vmatpush1.bf16.msra.mxu0 0
        %3688 = vmatprep.subr.bf16.mxu0 0
        %3689 = vmatpush1.bf16.msra.mxu0 0
        %3690 = vmatprep.subr.bf16.mxu0 0
        %3691 = vmatpush1.bf16.msra.mxu0 0
        %3692 = vmatprep.subr.bf16.mxu0 0
        %3693 = vmatpush1.bf16.msra.mxu0 0
        %3694 = vmatprep.subr.bf16.mxu0 0
        %3695 = vmatpush1.bf16.msra.mxu0 0
        %3696 = vmatprep.subr.bf16.mxu0 0
        %3697 = vmatpush1.bf16.msra.mxu0 0
        %3698 = vmatprep.subr.bf16.mxu0 0
        %3699 = vmatpush1.bf16.msra.mxu0 0
        %3700 = vmatprep.subr.bf16.mxu0 0
        %3701 = vmatpush1.bf16.msra.mxu0 0
        %3702 = vmatprep.subr.bf16.mxu0 0
        %3703 = vmatpush1.bf16.msra.mxu0 0
        %3704 = vmatprep.subr.bf16.mxu0 0
        %3705 = vmatpush1.bf16.msra.mxu0 0
        %3706 = vmatprep.subr.bf16.mxu0 0
        %3707 = vmatpush1.bf16.msra.mxu0 0
        %3708 = vmatprep.subr.bf16.mxu0 0
        %3709 = vmatpush1.bf16.msra.mxu0 0
        %3710 = vmatprep.subr.bf16.mxu0 0
        %3711 = vmatpush1.bf16.msra.mxu0 0
        %3712 = vmatprep.mubr.bf16.mxu0 0
        %3713 = vmatmul.mubr.bf16.gmra.mrb[0].mxu0 %v3579
        %v3714 = vpop.f32.mrb[0].mxu0
        %v3715 = vadd.f32 %v3575, %v3714
        %v3716 = vpop.f32.mrb[0].mxu0
        %v3717 = vadd.f32 %v3575, %v3716
        %v3718 = vpop.f32.mrb[0].mxu0
        %v3719 = vpop.f32.mrb[0].mxu0
        %3720 = vdwg.mxu0
        %3721 = vmatprep.subr.bf16.mxu0 %v3563
        %3722 = vmatpush1.bf16.msra.mxu0 %v3540
        %3723 = vmatprep.subr.bf16.mxu0 %v3566
        %3724 = vmatpush1.bf16.msra.mxu0 %v3543
        %3725 = vmatprep.subr.bf16.mxu0 %v3596
        %3726 = vmatpush1.bf16.msra.mxu0 %v3594
        %3727 = vmatprep.subr.bf16.mxu0 0
        %3728 = vmatpush1.bf16.msra.mxu0 0
        %3729 = vmatprep.subr.bf16.mxu0 0
        %3730 = vmatpush1.bf16.msra.mxu0 0
        %3731 = vmatprep.subr.bf16.mxu0 0
        %3732 = vmatpush1.bf16.msra.mxu0 0
        %3733 = vmatprep.subr.bf16.mxu0 0
        %3734 = vmatpush1.bf16.msra.mxu0 0
        %3735 = vmatprep.subr.bf16.mxu0 0
        %3736 = vmatpush1.bf16.msra.mxu0 0
        %3737 = vmatprep.subr.bf16.mxu0 0
        %3738 = vmatpush1.bf16.msra.mxu0 0
        %3739 = vmatprep.subr.bf16.mxu0 0
        %3740 = vmatpush1.bf16.msra.mxu0 0
        %3741 = vmatprep.subr.bf16.mxu0 0
        %3742 = vmatpush1.bf16.msra.mxu0 0
        %3743 = vmatprep.subr.bf16.mxu0 0
        %3744 = vmatpush1.bf16.msra.mxu0 0
        %3745 = vmatprep.subr.bf16.mxu0 0
        %3746 = vmatpush1.bf16.msra.mxu0 0
        %3747 = vmatprep.subr.bf16.mxu0 0
        %3748 = vmatpush1.bf16.msra.mxu0 0
        %3749 = vmatprep.subr.bf16.mxu0 0
        %3750 = vmatpush1.bf16.msra.mxu0 0
        %3751 = vmatprep.subr.bf16.mxu0 0
        %3752 = vmatpush1.bf16.msra.mxu0 0
        %3753 = vmatprep.mubr.bf16.mxu0 0
        %3754 = vmatmul.mubr.bf16.gmra.mrb[0].mxu0 %v3579
        %v3755 = vpop.f32.mrb[0].mxu0
        %v3756 = vadd.f32 %v3575, %v3755
        %v3757 = vpop.f32.mrb[0].mxu0
        %v3758 = vadd.f32 %v3575, %v3757
        %v3759 = vpop.f32.mrb[0].mxu0
        %v3760 = vpop.f32.mrb[0].mxu0
        %3761 = vdwg.mxu0
        %v3762 = vmax.f32 %v3633, 0.0
        %v3763 = vmax.f32 %v3635, 0.0
        %v3764 = vmax.f32 %v3674, 0.0
        %v3765 = vmax.f32 %v3676, 0.0
        %v3766 = vmax.f32 %v3715, 0.0
        %v3767 = vmax.f32 %v3717, 0.0
        %v3768 = vmax.f32 %v3756, 0.0
        %v3769 = vmax.f32 %v3758, 0.0
        %3770 = vst [vmem:[%s246] sm:$0xff] %v3762
        %3771 = vst [vmem:[%s246 + $0x8] sm:$0xff] %v3763
        %3772 = vst [vmem:[%s246 + $0x10] sm:$0xff] %v3764
        %3773 = vst [vmem:[%s246 + $0x18] sm:$0xff] %v3765
        %3774 = vst [vmem:[%s246 + $0x20] sm:$0xff] %v3766
        %3775 = vst [vmem:[%s246 + $0x28] sm:$0xff] %v3767
        %3776 = vst [vmem:[%s246 + $0x30] sm:$0xff] %v3768
        %3777 = vst [vmem:[%s246 + $0x38] sm:$0xff] %v3769
        %s3778 = sand.u32 %s156, 1
        %s3779 = scalar_lea.sflag [#allocation3], %s3778
        %s3780 = sand.u32 %s156, 1
        %s3781 = smul.addr %s3780, 64
        %s3782 = scalar_lea.vmem [#allocation2], %s3781
        // Predicated region
        $region41: #{tpu_custom_call.1} parent=39 // pred_check
          %p3783 = pneg %p166
        $region42: #{tpu_custom_call.1} parent=39 // pred_check_branch
          %3785 = sbr.rel (%p3783) target = $region44
        $region43: #{tpu_custom_call.1} parent=39 // pred_region
          %s3786 = smul.u32 8, %s24
          %s3788 = ssub.s32 1024, 1024
          %3789 = vsyncadd %s3779, %s3788
          %s3790 = smul.addr %s23, 8
          %s3791 = sadd.s32 %s3786, %s3790
          %s3792 = smul.addr %s3791, 128
          %s3793 = scalar_lea.hbm %s5, %s3792
          %s3795 = sshll.u32 %s3782, 4
          %s3796 = int_to_ptr.vmem [resolvable:$true] %s3795
          %3798 = dma.vmem_to_hbm [thread:$0]  %s3796, 1024, %s3793, %s3779
        $region44: #{tpu_custom_call.1} parent=39 // pred_fallthru
          _
      $region40: #{tpu_custom_call.1} parent=5 // pred_fallthru
        _
      %p3799 = scmp.le.s32.totalorder 2, %s14
      // Predicated region
      $region45: #{tpu_custom_call.1} parent=5 // pred_check
        %p3800 = pneg %p3799
      $region46: #{tpu_custom_call.1} parent=5 // pred_check_branch
        %3802 = sbr.rel (%p3800) target = $region48
      $region47: #{tpu_custom_call.1} parent=5 // pred_region
        %s3803 = ssub.s32 %s14, 2
        // Predicated region
        $region49: #{tpu_custom_call.1} parent=47 // pred_check
          %p3804 = pneg %p172
        $region50: #{tpu_custom_call.1} parent=47 // pred_check_branch
          %3806 = sbr.rel (%p3804) target = $region52
        $region51: #{tpu_custom_call.1} parent=47 // pred_region
          %s3807 = sand.u32 %s157, 1
          %s3808 = scalar_lea.sflag [#allocation3], %s3807
          %s3809 = sand.u32 %s157, 1
          %s3810 = smul.addr %s3809, 64
          %s3811 = scalar_lea.vmem [#allocation2], %s3810
          %3812 = dma.done %s3808, 1024
        $region52: #{tpu_custom_call.1} parent=47 // pred_fallthru
          _
      $region48: #{tpu_custom_call.1} parent=5 // pred_fallthru
        _
    $region6: #{tpu_custom_call.1} parent=1 // loop_footer
      %s18 = sadd.s32 1, %s14
    $region7: #{tpu_custom_call.1} parent=1 // loop_footer_branch
      %13 = sbr.rel target = $region3
    $region8: #{tpu_custom_call.1} parent=1 // loop_exit
      _
    %3813 = vsyncpa [#allocation3], 1
    %s3814 = scalar_lea.sflag [#allocation3], 1
    %3815 = vsyncpa %s3814, 1

</llo_original>
